<compile_context>
chip_gen: v5e
topology: v5e:2x2
jax: 0.10.0
libtpu: 0.0.40
codegen_flags: <defaults>
</compile_context>

<pallas_src>
import jax
import jax.numpy as jnp
from jax import lax
from jax.experimental import pallas as pl
from jax.experimental.pallas import tpu as pltpu

LANE = 128
FPAD = 128        # padded input-feature width  (real = input_features)
HPAD = 128        # padded hidden width         (real = 10)
OPAD = 128        # padded output width         (real = 3)
HIDDEN = 10
OUT = 3
TM_F = 128        # row tile used inside the fused small-graph kernel


# --------------------------------------------------------------------------
# helpers
# --------------------------------------------------------------------------
def _round_up(n, m):
    return (n + m - 1) // m * m


def _pad2(a, rows, cols, dtype=None):
    out = jnp.zeros((rows, cols), a.dtype)
    out = out.at[: a.shape[0], : a.shape[1]].set(a)
    return out.astype(dtype) if dtype is not None else out


def _vmem_limit_bytes():
    """Generation-aware VMEM budget (3/4 of per-core capacity, clamped)."""
    cap = None
    try:
        info = pltpu.get_tpu_info()
        cap = getattr(info, "vmem_capacity_bytes", None)
    except Exception:
        cap = None
    if not cap:
        cap = 64 * 1024 * 1024          # conservative default (v7x per-core)
    limit = int(cap) * 3 // 4
    return max(32 * 1024 * 1024, min(limit, 100 * 1024 * 1024))


def _choose_tiles(npad):
    """A-tile sizes for the tiled path; keep >= 2 row tiles for megacore."""
    tm = 256 if (npad % 256 == 0 and npad // 256 >= 2) else 128
    if npad % 512 == 0:
        tk = 512
    elif npad % 256 == 0:
        tk = 256
    else:
        tk = 128
    return tm, tk


def build_adjacency(edge_index, num_nodes, padded_nodes):
    """Unnormalized edge-count matrix A[i,j] = #edges j->i (bf16, exact for
    small counts) plus f32 inv_deg[i] = 1/max(in_deg(i),1)."""
    src = edge_index[0]
    tgt = edge_index[1]
    counts = jnp.zeros((padded_nodes, padded_nodes), jnp.float32)
    counts = counts.at[tgt, src].add(jnp.ones(src.shape[0], jnp.float32))
    deg = counts.sum(axis=1, keepdims=True)
    inv_deg = 1.0 / jnp.maximum(deg, 1.0)
    return counts.astype(jnp.bfloat16), inv_deg.astype(jnp.float32)


# --------------------------------------------------------------------------
# kernel 1 (tiled path): h0 = relu(x @ W1 + b1)   (dropout p=0.5 == identity
# in eval mode)
# --------------------------------------------------------------------------
def lin_relu_kernel(x_ref, w_ref, b_ref, out_ref):
    h = jnp.dot(x_ref[...], w_ref[...], preferred_element_type=jnp.float32)
    h = h + b_ref[...]
    out_ref[...] = jnp.maximum(h, 0.0).astype(out_ref.dtype)


def lin_relu(x_p, w, b, tm, vmem_limit):
    npad, fpad = x_p.shape
    hpad = w.shape[1]
    return pl.pallas_call(
        lin_relu_kernel,
        out_shape=jax.ShapeDtypeStruct((npad, hpad), jnp.bfloat16),
        grid_spec=pltpu.PrefetchScalarGridSpec(
            num_scalar_prefetch=0,
            grid=(npad // tm,),
            in_specs=[
                pl.BlockSpec((tm, fpad), lambda i: (i, 0)),
                pl.BlockSpec((fpad, hpad), lambda i: (0, 0)),
                pl.BlockSpec((1, hpad), lambda i: (0, 0)),
            ],
            out_specs=pl.BlockSpec((tm, hpad), lambda i: (i, 0)),
        ),
        compiler_params=pltpu.CompilerParams(
            dimension_semantics=("parallel",),
            vmem_limit_bytes=vmem_limit,
        ),
    )(x_p, w, b)


# --------------------------------------------------------------------------
# kernel 2 (tiled path): one SAGEConv layer (optionally fused with lin2):
#   acc = A @ h                  (bf16 MXU, f32 VMEM accumulator over axis 1)
#   agg = acc * inv_deg          (f32, once per output row in the epilogue)
#   out = agg @ Wl + bl + h_row @ Wr   [ @ W2 + b2   if with_proj ]
# --------------------------------------------------------------------------
def make_sage_kernel(with_proj, h_resident):
    def kernel(*refs):
        idx = 0
        a_ref = refs[idx]; idx += 1
        h_ref = refs[idx]; idx += 1          # resident: full h; else: k-tile
        hi_ref = None
        if not h_resident:
            hi_ref = refs[idx]; idx += 1     # root rows (streaming fallback)
        invd_ref = refs[idx]; idx += 1
        wl_ref = refs[idx]; idx += 1
        bl_ref = refs[idx]; idx += 1
        wr_ref = refs[idx]; idx += 1
        if with_proj:
            w2_ref = refs[idx]; idx += 1
            b2_ref = refs[idx]; idx += 1
        out_ref = refs[idx]; idx += 1
        acc_ref = refs[idx]

        tm = a_ref.shape[0]
        tk = a_ref.shape[1]
        i = pl.program_id(0)
        k = pl.program_id(1)

        @pl.when(k == 0)
        def _():
            acc_ref[...] = jnp.zeros_like(acc_ref)

        if h_resident:
            ks = pl.multiple_of(k * tk, tk)
            hk = h_ref[pl.ds(ks, tk), :]
        else:
            hk = h_ref[...]

        # dominant work: bf16 x bf16 -> f32 accumulate on the MXU
        acc_ref[...] += jnp.dot(a_ref[...], hk,
                                preferred_element_type=jnp.float32)

        # epilogue: degree normalization + tiny dense transforms, only on the
        # last reduction step -> the inner loop stays pure matmul.
        @pl.when(k == pl.num_programs(1) - 1)
        def _():
            agg = acc_ref[...] * invd_ref[...]
            if h_resident:
                rs = pl.multiple_of(i * tm, tm)
                h_root = h_ref[pl.ds(rs, tm), :]
            else:
                h_root = hi_ref[...]
            h_new = (
                jnp.dot(agg.astype(jnp.bfloat16), wl_ref[...],
                        preferred_element_type=jnp.float32)
                + bl_ref[...]
                + jnp.dot(h_root, wr_ref[...],
                          preferred_element_type=jnp.float32)
            )
            if with_proj:
                y = jnp.dot(h_new.astype(jnp.bfloat16), w2_ref[...],
                            preferred_element_type=jnp.float32) + b2_ref[...]
                out_ref[...] = y.astype(out_ref.dtype)
            else:
                out_ref[...] = h_new.astype(out_ref.dtype)

    return kernel


def sage_layer(a, inv_deg, h, wl, bl, wr, w2=None, b2=None,
               out_dtype=jnp.bfloat16, tm=128, tk=128,
               vmem_limit=64 * 1024 * 1024):
    npad = a.shape[0]
    hpad = h.shape[1]
    with_proj = w2 is not None
    out_cols = w2.shape[1] if with_proj else hpad

    # resident h: double-buffered bf16 copy must stay a small fraction of VMEM
    h_resident = (2 * npad * hpad * 2) <= (vmem_limit // 4)

    in_specs = [pl.BlockSpec((tm, tk), lambda i, k: (i, k))]       # A tile
    args = [a]
    if h_resident:
        in_specs.append(pl.BlockSpec((npad, hpad), lambda i, k: (0, 0)))
        args.append(h)
    else:
        # streaming fallback for very large graphs
        in_specs.append(pl.BlockSpec((tk, hpad), lambda i, k: (k, 0)))
        in_specs.append(pl.BlockSpec((tm, hpad), lambda i, k: (i, 0)))
        args += [h, h]
    in_specs += [
        pl.BlockSpec((tm, 1), lambda i, k: (i, 0)),                # inv_deg
        pl.BlockSpec((hpad, hpad), lambda i, k: (0, 0)),           # Wl
        pl.BlockSpec((1, hpad), lambda i, k: (0, 0)),              # bl
        pl.BlockSpec((hpad, hpad), lambda i, k: (0, 0)),           # Wr
    ]
    args += [inv_deg, wl, bl, wr]
    if with_proj:
        in_specs += [
            pl.BlockSpec((hpad, out_cols), lambda i, k: (0, 0)),   # W2
            pl.BlockSpec((1, out_cols), lambda i, k: (0, 0)),      # b2
        ]
        args += [w2, b2]

    return pl.pallas_call(
        make_sage_kernel(with_proj, h_resident),
        out_shape=jax.ShapeDtypeStruct((npad, out_cols), out_dtype),
        grid_spec=pltpu.PrefetchScalarGridSpec(
            num_scalar_prefetch=0,
            grid=(npad // tm, npad // tk),
            in_specs=in_specs,
            out_specs=pl.BlockSpec((tm, out_cols), lambda i, k: (i, 0)),
            scratch_shapes=[pltpu.VMEM((tm, hpad), jnp.float32)],
        ),
        compiler_params=pltpu.CompilerParams(
            dimension_semantics=("parallel", "arbitrary"),
            vmem_limit_bytes=vmem_limit,
        ),
    )(*args)


# --------------------------------------------------------------------------
# fused single-kernel path for small graphs: A, x, h0, h1 all resident in
# VMEM; lin1 -> sage1 -> sage2 -> lin2 with an internal row-tile loop.
# --------------------------------------------------------------------------
def make_fused_kernel(n_tiles):
    def kernel(a_ref, invd_ref, x_ref, w1_ref, b1_ref,
               wl1_ref, bl1_ref, wr1_ref,
               wl2_ref, bl2_ref, wr2_ref,
               w2_ref, b2_ref, out_ref, h0_ref, h1_ref):

        def lin1_body(r, carry):
            rs = pl.multiple_of(r * TM_F, TM_F)
            h = jnp.dot(x_ref[pl.ds(rs, TM_F), :], w1_ref[...],
                        preferred_element_type=jnp.float32) + b1_ref[...]
            h0_ref[pl.ds(rs, TM_F), :] = jnp.maximum(h, 0.0).astype(h0_ref.dtype)
            return carry

        lax.fori_loop(0, n_tiles, lin1_body, 0)

        def sage1_body(r, carry):
            rs = pl.multiple_of(r * TM_F, TM_F)
            agg = jnp.dot(a_ref[pl.ds(rs, TM_F), :], h0_ref[...],
                          preferred_element_type=jnp.float32)
            agg = agg * invd_ref[pl.ds(rs, TM_F), :]
            hn = (jnp.dot(agg.astype(jnp.bfloat16), wl1_ref[...],
                          preferred_element_type=jnp.float32)
                  + bl1_ref[...]
                  + jnp.dot(h0_ref[pl.ds(rs, TM_F), :], wr1_ref[...],
                            preferred_element_type=jnp.float32))
            h1_ref[pl.ds(rs, TM_F), :] = hn.astype(h1_ref.dtype)
            return carry

        lax.fori_loop(0, n_tiles, sage1_body, 0)

        def sage2_body(r, carry):
            rs = pl.multiple_of(r * TM_F, TM_F)
            agg = jnp.dot(a_ref[pl.ds(rs, TM_F), :], h1_ref[...],
                          preferred_element_type=jnp.float32)
            agg = agg * invd_ref[pl.ds(rs, TM_F), :]
            hn = (jnp.dot(agg.astype(jnp.bfloat16), wl2_ref[...],
                          preferred_element_type=jnp.float32)
                  + bl2_ref[...]
                  + jnp.dot(h1_ref[pl.ds(rs, TM_F), :], wr2_ref[...],
                            preferred_element_type=jnp.float32))
            y = jnp.dot(hn.astype(jnp.bfloat16), w2_ref[...],
                        preferred_element_type=jnp.float32) + b2_ref[...]
            out_ref[pl.ds(rs, TM_F), :] = y.astype(out_ref.dtype)
            return carry

        lax.fori_loop(0, n_tiles, sage2_body, 0)

    return kernel


def fused_forward(a, inv_deg, x_p, p, npad, vmem_limit):
    n_tiles = npad // TM_F

    def full(shape):
        return pl.BlockSpec(shape, lambda i: (0, 0))

    in_specs = [
        full((npad, npad)),          # A (counts, bf16)
        full((npad, 1)),             # inv_deg (f32)
        full((npad, FPAD)),          # x
        full((FPAD, HPAD)), full((1, HPAD)),          # W1, b1
        full((HPAD, HPAD)), full((1, HPAD)), full((HPAD, HPAD)),  # Wl1,bl1,Wr1
        full((HPAD, HPAD)), full((1, HPAD)), full((HPAD, HPAD)),  # Wl2,bl2,Wr2
        full((HPAD, OPAD)), full((1, OPAD)),          # W2, b2
    ]
    args = [a, inv_deg, x_p,
            p["w1"], p["b1"],
            p["wl1"], p["bl1"], p["wr1"],
            p["wl2"], p["bl2"], p["wr2"],
            p["w2"], p["b2"]]

    return pl.pallas_call(
        make_fused_kernel(n_tiles),
        out_shape=jax.ShapeDtypeStruct((npad, OPAD), jnp.float32),
        grid_spec=pltpu.PrefetchScalarGridSpec(
            num_scalar_prefetch=0,
            grid=(1,),
            in_specs=in_specs,
            out_specs=full((npad, OPAD)),
            scratch_shapes=[pltpu.VMEM((npad, HPAD), jnp.bfloat16),
                            pltpu.VMEM((npad, HPAD), jnp.bfloat16)],
        ),
        compiler_params=pltpu.CompilerParams(
            dimension_semantics=("arbitrary",),
            vmem_limit_bytes=vmem_limit,
        ),
    )(*args)


# --------------------------------------------------------------------------
# full forward
# --------------------------------------------------------------------------
def pad_params(p):
    bf = jnp.bfloat16
    return {
        "w1": _pad2(p["w1"], FPAD, HPAD, bf),
        "b1": _pad2(p["b1"], 1, HPAD, bf),
        "wl1": _pad2(p["wl1"], HPAD, HPAD, bf),
        "bl1": _pad2(p["bl1"], 1, HPAD, bf),
        "wr1": _pad2(p["wr1"], HPAD, HPAD, bf),
        "wl2": _pad2(p["wl2"], HPAD, HPAD, bf),
        "bl2": _pad2(p["bl2"], 1, HPAD, bf),
        "wr2": _pad2(p["wr2"], HPAD, HPAD, bf),
        "w2": _pad2(p["w2"], HPAD, OPAD, bf),
        "b2": _pad2(p["b2"], 1, OPAD, bf),
    }


def _fused_fits(npad, vmem_limit):
    a_bytes = npad * npad * 2                       # A (bf16)
    act_bytes = npad * (FPAD * 2 + 2 * HPAD * 2 + OPAD * 4 + 4)
    weight_bytes = (FPAD * HPAD + 6 * HPAD * HPAD + HPAD * OPAD + 5 * HPAD
                    + OPAD) * 2
    return (a_bytes + act_bytes + weight_bytes) <= (vmem_limit // 3)


def demo_ai_forward(x, edge_index, raw_params, force_tiled=False):
    n, f = x.shape
    assert f <= FPAD
    npad = _round_up(n, 128)

    p = pad_params(raw_params)
    a, inv_deg = build_adjacency(edge_index, n, npad)   # bf16 counts, f32 1/deg
    x_p = _pad2(x, npad, FPAD, jnp.bfloat16)
    vmem_limit = _vmem_limit_bytes()

    # TODO(synk): cache (a, inv_deg) across calls — rebuilding the dense
    #             adjacency every forward is the dominant wrapper cost.
    if (not force_tiled) and _fused_fits(npad, vmem_limit):
        y = fused_forward(a, inv_deg, x_p, p, npad, vmem_limit)
    else:
        tm, tk = _choose_tiles(npad)
        h0 = lin_relu(x_p, p["w1"], p["b1"], tm, vmem_limit)
        # TODO(synk): F.dropout(p=0.5) is identity in eval mode; training-mode
        # RNG dropout (pltpu.prng_*) is not reproduced here.
        h1 = sage_layer(a, inv_deg, h0, p["wl1"], p["bl1"], p["wr1"],
                        tm=tm, tk=tk, vmem_limit=vmem_limit)
        y = sage_layer(a, inv_deg, h1, p["wl2"], p["bl2"], p["wr2"],
                       w2=p["w2"], b2=p["b2"], out_dtype=jnp.float32,
                       tm=tm, tk=tk, vmem_limit=vmem_limit)
    return y[:n, :OUT]


# --------------------------------------------------------------------------
# params + pure-JAX reference
# --------------------------------------------------------------------------
def init_raw_params(key, in_features, hidden=HIDDEN, out_features=OUT):
    ks = jax.random.split(key, 10)

    def lin(k, fi, fo):
        return jax.random.normal(k, (fi, fo), jnp.float32) * (1.0 / fi) ** 0.5

    return {
        "w1": lin(ks[0], in_features, hidden),
        "b1": jax.random.normal(ks[1], (1, hidden), jnp.float32) * 0.01,
        "wl1": lin(ks[2], hidden, hidden),
        "bl1": jax.random.normal(ks[3], (1, hidden), jnp.float32) * 0.01,
        "wr1": lin(ks[4], hidden, hidden),
        "wl2": lin(ks[5], hidden, hidden),
        "bl2": jax.random.normal(ks[6], (1, hidden), jnp.float32) * 0.01,
        "wr2": lin(ks[7], hidden, hidden),
        "w2": lin(ks[8], hidden, out_features),
        "b2": jax.random.normal(ks[9], (1, out_features), jnp.float32) * 0.01,
    }


def reference_forward(x, edge_index, p):
    n = x.shape[0]
    src, tgt = edge_index[0], edge_index[1]
    adj = jnp.zeros((n, n), jnp.float32).at[tgt, src].add(1.0)
    a = adj / jnp.maximum(adj.sum(axis=1, keepdims=True), 1.0)
    h = jnp.maximum(x @ p["w1"] + p["b1"], 0.0)
    h = (a @ h) @ p["wl1"] + p["bl1"] + h @ p["wr1"]
    h = (a @ h) @ p["wl2"] + p["bl2"] + h @ p["wr2"]
    return h @ p["w2"] + p["b2"]


# --------------------------------------------------------------------------
if __name__ == "__main__":
    key = jax.random.PRNGKey(0)
    k_x, k_e1, k_e2, k_p = jax.random.split(key, 4)

    # ---- case 1: demo size -> fused single-kernel path --------------------
    num_nodes = 256
    in_features = 8
    num_edges = 1024

    x = jax.random.normal(k_x, (num_nodes, in_features), jnp.float32)
    src = jax.random.randint(k_e1, (num_edges,), 0, num_nodes)
    tgt = jax.random.randint(k_e2, (num_edges,), 0, num_nodes)
    edge_index = jnp.stack([src, tgt], axis=0)  # [2, E]

    raw_params = init_raw_params(k_p, in_features)

    out = demo_ai_forward(x, edge_index, raw_params)
    jax.block_until_ready(out)
    assert out.shape == (num_nodes, OUT)
    ref = reference_forward(x, edge_index, raw_params)
    err1 = float(jnp.max(jnp.abs(out - ref)))
    assert err1 < 0.25, f"fused path max abs err {err1}"

    # ---- case 2: larger graph, forced through the tiled multi-kernel path -
    k_x2, k_e3, k_e4 = jax.random.split(k_x, 3)
    n2, m2 = 1024, 4096
    x2 = jax.random.normal(k_x2, (n2, in_features), jnp.float32)
    src2 = jax.random.randint(k_e3, (m2,), 0, n2)
    tgt2 = jax.random.randint(k_e4, (m2,), 0, n2)
    edge_index2 = jnp.stack([src2, tgt2], axis=0)

    out2 = demo_ai_forward(x2, edge_index2, raw_params, force_tiled=True)
    jax.block_until_ready(out2)
    assert out2.shape == (n2, OUT)
    ref2 = reference_forward(x2, edge_index2, raw_params)
    err2 = float(jnp.max(jnp.abs(out2 - ref2)))
    assert err2 < 0.25, f"tiled path max abs err {err2}"

    print("KERNEL_OK")
</pallas_src>

<mosaic_0001>
module attributes {stable_mosaic.version = 11 : i64} {
  func.func @kernel(%arg0: i32, %arg1: memref<256x256xbf16, #tpu.memory_space<vmem>>, %arg2: memref<256x1xf32, #tpu.memory_space<vmem>>, %arg3: memref<256x128xbf16, #tpu.memory_space<vmem>>, %arg4: memref<128x128xbf16, #tpu.memory_space<vmem>>, %arg5: memref<1x128xbf16, #tpu.memory_space<vmem>>, %arg6: memref<128x128xbf16, #tpu.memory_space<vmem>>, %arg7: memref<1x128xbf16, #tpu.memory_space<vmem>>, %arg8: memref<128x128xbf16, #tpu.memory_space<vmem>>, %arg9: memref<128x128xbf16, #tpu.memory_space<vmem>>, %arg10: memref<1x128xbf16, #tpu.memory_space<vmem>>, %arg11: memref<128x128xbf16, #tpu.memory_space<vmem>>, %arg12: memref<128x128xbf16, #tpu.memory_space<vmem>>, %arg13: memref<1x128xbf16, #tpu.memory_space<vmem>>, %arg14: memref<256x128xf32, #tpu.memory_space<vmem>>, %arg15: memref<256x128xbf16, #tpu.memory_space<vmem>>, %arg16: memref<256x128xbf16, #tpu.memory_space<vmem>>) attributes {dimension_semantics = [#tpu.dimension_semantics<arbitrary>], iteration_bounds = array<i64: 1>, scalar_prefetch = 0 : i64, scratch_operands = 2 : i64, tpu.core_type = #tpu.core_type<tc>, window_params = [{pipeline_mode = #tpu.pipeline_mode<synchronous>, transform_indices = @transform_0, window_bounds = array<i64: 256, 256>}, {pipeline_mode = #tpu.pipeline_mode<synchronous>, transform_indices = @transform_1, window_bounds = array<i64: 256, 1>}, {pipeline_mode = #tpu.pipeline_mode<synchronous>, transform_indices = @transform_2, window_bounds = array<i64: 256, 128>}, {pipeline_mode = #tpu.pipeline_mode<synchronous>, transform_indices = @transform_3, window_bounds = array<i64: 128, 128>}, {pipeline_mode = #tpu.pipeline_mode<synchronous>, transform_indices = @transform_4, window_bounds = array<i64: 1, 128>}, {pipeline_mode = #tpu.pipeline_mode<synchronous>, transform_indices = @transform_5, window_bounds = array<i64: 128, 128>}, {pipeline_mode = #tpu.pipeline_mode<synchronous>, transform_indices = @transform_6, window_bounds = array<i64: 1, 128>}, {pipeline_mode = #tpu.pipeline_mode<synchronous>, transform_indices = @transform_7, window_bounds = array<i64: 128, 128>}, {pipeline_mode = #tpu.pipeline_mode<synchronous>, transform_indices = @transform_8, window_bounds = array<i64: 128, 128>}, {pipeline_mode = #tpu.pipeline_mode<synchronous>, transform_indices = @transform_9, window_bounds = array<i64: 1, 128>}, {pipeline_mode = #tpu.pipeline_mode<synchronous>, transform_indices = @transform_10, window_bounds = array<i64: 128, 128>}, {pipeline_mode = #tpu.pipeline_mode<synchronous>, transform_indices = @transform_11, window_bounds = array<i64: 128, 128>}, {pipeline_mode = #tpu.pipeline_mode<synchronous>, transform_indices = @transform_12, window_bounds = array<i64: 1, 128>}, {pipeline_mode = #tpu.pipeline_mode<synchronous>, transform_indices = @transform_13, window_bounds = array<i64: 256, 128>}]} {
    %c0_i32 = arith.constant 0 : i32
    %c2_i32 = arith.constant 2 : i32
    %0 = arith.addi %c0_i32, %c2_i32 : i32
    %c1_i32 = arith.constant 1 : i32
    scf.for %arg17 = %c0_i32 to %0 step %c1_i32  : i32 {
      %c128_i32 = arith.constant 128 : i32
      %3 = arith.muli %arg17, %c128_i32 : i32
      %4 = tpu.assume_multiple %3, 128 : i32
      %5 = arith.index_cast %4 : i32 to index
      %c0 = arith.constant 0 : index
      %6 = vector.load %arg3[%5, %c0] : memref<256x128xbf16, #tpu.memory_space<vmem>>, vector<128x128xbf16>
      %c0_9 = arith.constant 0 : index
      %c0_10 = arith.constant 0 : index
      %7 = vector.load %arg4[%c0_9, %c0_10] : memref<128x128xbf16, #tpu.memory_space<vmem>>, vector<128x128xbf16>
      %cst = arith.constant dense<0.000000e+00> : vector<128x128xf32>
      %8 = tpu.matmul %6, %7, %cst {dimension_numbers = #tpu.dot_dimension_numbers<[1], [0], [0], [1], [0, 0, 1, 1], [], []>} : vector<128x128xbf16>, vector<128x128xbf16>, vector<128x128xf32> -> vector<128x128xf32>
      %c0_11 = arith.constant 0 : index
      %c0_12 = arith.constant 0 : index
      %9 = vector.load %arg5[%c0_11, %c0_12] : memref<1x128xbf16, #tpu.memory_space<vmem>>, vector<1x128xbf16>
      %10 = arith.extf %9 : vector<1x128xbf16> to vector<1x128xf32>
      %11 = vector.broadcast %10 : vector<1x128xf32> to vector<128x128xf32>
      %12 = arith.addf %8, %11 : vector<128x128xf32>
      %cst_13 = arith.constant 0.000000e+00 : f32
      %13 = vector.broadcast %cst_13 : f32 to vector<128x128xf32>
      %14 = arith.maximumf %12, %13 : vector<128x128xf32>
      %15 = arith.truncf %14 : vector<128x128xf32> to vector<128x128xbf16>
      %16 = arith.index_cast %4 : i32 to index
      %c0_14 = arith.constant 0 : index
      %17 = vector.load %arg15[%16, %c0_14] : memref<256x128xbf16, #tpu.memory_space<vmem>>, vector<128x128xbf16>
      tpu.vector_store %arg15[%16, %c0_14], %15 {strides = array<i32>} : memref<256x128xbf16, #tpu.memory_space<vmem>>, vector<128x128xbf16>,
    }
    %c2_i32_0 = arith.constant 2 : i32
    %c0_i32_1 = arith.constant 0 : i32
    %c2_i32_2 = arith.constant 2 : i32
    %1 = arith.addi %c0_i32_1, %c2_i32_2 : i32
    %c1_i32_3 = arith.constant 1 : i32
    scf.for %arg17 = %c0_i32_1 to %1 step %c1_i32_3  : i32 {
      %c128_i32 = arith.constant 128 : i32
      %3 = arith.muli %arg17, %c128_i32 : i32
      %4 = tpu.assume_multiple %3, 128 : i32
      %5 = arith.index_cast %4 : i32 to index
      %c0 = arith.constant 0 : index
      %6 = vector.load %arg1[%5, %c0] : memref<256x256xbf16, #tpu.memory_space<vmem>>, vector<128x256xbf16>
      %c0_9 = arith.constant 0 : index
      %c0_10 = arith.constant 0 : index
      %7 = vector.load %arg15[%c0_9, %c0_10] : memref<256x128xbf16, #tpu.memory_space<vmem>>, vector<256x128xbf16>
      %cst = arith.constant dense<0.000000e+00> : vector<128x128xf32>
      %8 = tpu.matmul %6, %7, %cst {dimension_numbers = #tpu.dot_dimension_numbers<[1], [0], [0], [1], [0, 0, 1, 1], [], []>} : vector<128x256xbf16>, vector<256x128xbf16>, vector<128x128xf32> -> vector<128x128xf32>
      %9 = arith.index_cast %4 : i32 to index
      %c0_11 = arith.constant 0 : index
      %10 = vector.load %arg2[%9, %c0_11] : memref<256x1xf32, #tpu.memory_space<vmem>>, vector<128x1xf32>
      %11 = vector.broadcast %10 : vector<128x1xf32> to vector<128x128xf32>
      %12 = arith.mulf %8, %11 : vector<128x128xf32>
      %13 = arith.truncf %12 : vector<128x128xf32> to vector<128x128xbf16>
      %c0_12 = arith.constant 0 : index
      %c0_13 = arith.constant 0 : index
      %14 = vector.load %arg6[%c0_12, %c0_13] : memref<128x128xbf16, #tpu.memory_space<vmem>>, vector<128x128xbf16>
      %cst_14 = arith.constant dense<0.000000e+00> : vector<128x128xf32>
      %15 = tpu.matmul %13, %14, %cst_14 {dimension_numbers = #tpu.dot_dimension_numbers<[1], [0], [0], [1], [0, 0, 1, 1], [], []>} : vector<128x128xbf16>, vector<128x128xbf16>, vector<128x128xf32> -> vector<128x128xf32>
      %c0_15 = arith.constant 0 : index
      %c0_16 = arith.constant 0 : index
      %16 = vector.load %arg7[%c0_15, %c0_16] : memref<1x128xbf16, #tpu.memory_space<vmem>>, vector<1x128xbf16>
      %17 = arith.extf %16 : vector<1x128xbf16> to vector<1x128xf32>
      %18 = vector.broadcast %17 : vector<1x128xf32> to vector<128x128xf32>
      %19 = arith.addf %15, %18 : vector<128x128xf32>
      %20 = arith.index_cast %4 : i32 to index
      %c0_17 = arith.constant 0 : index
      %21 = vector.load %arg15[%20, %c0_17] : memref<256x128xbf16, #tpu.memory_space<vmem>>, vector<128x128xbf16>
      %c0_18 = arith.constant 0 : index
      %c0_19 = arith.constant 0 : index
      %22 = vector.load %arg8[%c0_18, %c0_19] : memref<128x128xbf16, #tpu.memory_space<vmem>>, vector<128x128xbf16>
      %cst_20 = arith.constant dense<0.000000e+00> : vector<128x128xf32>
      %23 = tpu.matmul %21, %22, %cst_20 {dimension_numbers = #tpu.dot_dimension_numbers<[1], [0], [0], [1], [0, 0, 1, 1], [], []>} : vector<128x128xbf16>, vector<128x128xbf16>, vector<128x128xf32> -> vector<128x128xf32>
      %24 = arith.addf %19, %23 : vector<128x128xf32>
      %25 = arith.truncf %24 : vector<128x128xf32> to vector<128x128xbf16>
      %26 = arith.index_cast %4 : i32 to index
      %c0_21 = arith.constant 0 : index
      %27 = vector.load %arg16[%26, %c0_21] : memref<256x128xbf16, #tpu.memory_space<vmem>>, vector<128x128xbf16>
      tpu.vector_store %arg16[%26, %c0_21], %25 {strides = array<i32>} : memref<256x128xbf16, #tpu.memory_space<vmem>>, vector<128x128xbf16>,
    }
    %c2_i32_4 = arith.constant 2 : i32
    %c0_i32_5 = arith.constant 0 : i32
    %c2_i32_6 = arith.constant 2 : i32
    %2 = arith.addi %c0_i32_5, %c2_i32_6 : i32
    %c1_i32_7 = arith.constant 1 : i32
    scf.for %arg17 = %c0_i32_5 to %2 step %c1_i32_7  : i32 {
      %c128_i32 = arith.constant 128 : i32
      %3 = arith.muli %arg17, %c128_i32 : i32
      %4 = tpu.assume_multiple %3, 128 : i32
      %5 = arith.index_cast %4 : i32 to index
      %c0 = arith.constant 0 : index
      %6 = vector.load %arg1[%5, %c0] : memref<256x256xbf16, #tpu.memory_space<vmem>>, vector<128x256xbf16>
      %c0_9 = arith.constant 0 : index
      %c0_10 = arith.constant 0 : index
      %7 = vector.load %arg16[%c0_9, %c0_10] : memref<256x128xbf16, #tpu.memory_space<vmem>>, vector<256x128xbf16>
      %cst = arith.constant dense<0.000000e+00> : vector<128x128xf32>
      %8 = tpu.matmul %6, %7, %cst {dimension_numbers = #tpu.dot_dimension_numbers<[1], [0], [0], [1], [0, 0, 1, 1], [], []>} : vector<128x256xbf16>, vector<256x128xbf16>, vector<128x128xf32> -> vector<128x128xf32>
      %9 = arith.index_cast %4 : i32 to index
      %c0_11 = arith.constant 0 : index
      %10 = vector.load %arg2[%9, %c0_11] : memref<256x1xf32, #tpu.memory_space<vmem>>, vector<128x1xf32>
      %11 = vector.broadcast %10 : vector<128x1xf32> to vector<128x128xf32>
      %12 = arith.mulf %8, %11 : vector<128x128xf32>
      %13 = arith.truncf %12 : vector<128x128xf32> to vector<128x128xbf16>
      %c0_12 = arith.constant 0 : index
      %c0_13 = arith.constant 0 : index
      %14 = vector.load %arg9[%c0_12, %c0_13] : memref<128x128xbf16, #tpu.memory_space<vmem>>, vector<128x128xbf16>
      %cst_14 = arith.constant dense<0.000000e+00> : vector<128x128xf32>
      %15 = tpu.matmul %13, %14, %cst_14 {dimension_numbers = #tpu.dot_dimension_numbers<[1], [0], [0], [1], [0, 0, 1, 1], [], []>} : vector<128x128xbf16>, vector<128x128xbf16>, vector<128x128xf32> -> vector<128x128xf32>
      %c0_15 = arith.constant 0 : index
      %c0_16 = arith.constant 0 : index
      %16 = vector.load %arg10[%c0_15, %c0_16] : memref<1x128xbf16, #tpu.memory_space<vmem>>, vector<1x128xbf16>
      %17 = arith.extf %16 : vector<1x128xbf16> to vector<1x128xf32>
      %18 = vector.broadcast %17 : vector<1x128xf32> to vector<128x128xf32>
      %19 = arith.addf %15, %18 : vector<128x128xf32>
      %20 = arith.index_cast %4 : i32 to index
      %c0_17 = arith.constant 0 : index
      %21 = vector.load %arg16[%20, %c0_17] : memref<256x128xbf16, #tpu.memory_space<vmem>>, vector<128x128xbf16>
      %c0_18 = arith.constant 0 : index
      %c0_19 = arith.constant 0 : index
      %22 = vector.load %arg11[%c0_18, %c0_19] : memref<128x128xbf16, #tpu.memory_space<vmem>>, vector<128x128xbf16>
      %cst_20 = arith.constant dense<0.000000e+00> : vector<128x128xf32>
      %23 = tpu.matmul %21, %22, %cst_20 {dimension_numbers = #tpu.dot_dimension_numbers<[1], [0], [0], [1], [0, 0, 1, 1], [], []>} : vector<128x128xbf16>, vector<128x128xbf16>, vector<128x128xf32> -> vector<128x128xf32>
      %24 = arith.addf %19, %23 : vector<128x128xf32>
      %25 = arith.truncf %24 : vector<128x128xf32> to vector<128x128xbf16>
      %c0_21 = arith.constant 0 : index
      %c0_22 = arith.constant 0 : index
      %26 = vector.load %arg12[%c0_21, %c0_22] : memref<128x128xbf16, #tpu.memory_space<vmem>>, vector<128x128xbf16>
      %cst_23 = arith.constant dense<0.000000e+00> : vector<128x128xf32>
      %27 = tpu.matmul %25, %26, %cst_23 {dimension_numbers = #tpu.dot_dimension_numbers<[1], [0], [0], [1], [0, 0, 1, 1], [], []>} : vector<128x128xbf16>, vector<128x128xbf16>, vector<128x128xf32> -> vector<128x128xf32>
      %c0_24 = arith.constant 0 : index
      %c0_25 = arith.constant 0 : index
      %28 = vector.load %arg13[%c0_24, %c0_25] : memref<1x128xbf16, #tpu.memory_space<vmem>>, vector<1x128xbf16>
      %29 = arith.extf %28 : vector<1x128xbf16> to vector<1x128xf32>
      %30 = vector.broadcast %29 : vector<1x128xf32> to vector<128x128xf32>
      %31 = arith.addf %27, %30 : vector<128x128xf32>
      %32 = arith.index_cast %4 : i32 to index
      %c0_26 = arith.constant 0 : index
      %33 = vector.load %arg14[%32, %c0_26] : memref<256x128xf32, #tpu.memory_space<vmem>>, vector<128x128xf32>
      tpu.vector_store %arg14[%32, %c0_26], %31 {strides = array<i32>} : memref<256x128xf32, #tpu.memory_space<vmem>>, vector<128x128xf32>,
    }
    %c2_i32_8 = arith.constant 2 : i32
    return
  }
  func.func @transform_0(%arg0: i32) -> (i32, i32) {
    %c0_i32 = arith.constant 0 : i32
    %c0_i32_0 = arith.constant 0 : i32
    %c0_i32_1 = arith.constant 0 : i32
    return %c0_i32, %c0_i32_0 : i32, i32
  }
  func.func @transform_1(%arg0: i32) -> (i32, i32) {
    %c0_i32 = arith.constant 0 : i32
    %c0_i32_0 = arith.constant 0 : i32
    %c0_i32_1 = arith.constant 0 : i32
    return %c0_i32, %c0_i32_0 : i32, i32
  }
  func.func @transform_2(%arg0: i32) -> (i32, i32) {
    %c0_i32 = arith.constant 0 : i32
    %c0_i32_0 = arith.constant 0 : i32
    %c0_i32_1 = arith.constant 0 : i32
    return %c0_i32, %c0_i32_0 : i32, i32
  }
  func.func @transform_3(%arg0: i32) -> (i32, i32) {
    %c0_i32 = arith.constant 0 : i32
    %c0_i32_0 = arith.constant 0 : i32
    %c0_i32_1 = arith.constant 0 : i32
    return %c0_i32, %c0_i32_0 : i32, i32
  }
  func.func @transform_4(%arg0: i32) -> (i32, i32) {
    %c0_i32 = arith.constant 0 : i32
    %c0_i32_0 = arith.constant 0 : i32
    %c0_i32_1 = arith.constant 0 : i32
    return %c0_i32, %c0_i32_0 : i32, i32
  }
  func.func @transform_5(%arg0: i32) -> (i32, i32) {
    %c0_i32 = arith.constant 0 : i32
    %c0_i32_0 = arith.constant 0 : i32
    %c0_i32_1 = arith.constant 0 : i32
    return %c0_i32, %c0_i32_0 : i32, i32
  }
  func.func @transform_6(%arg0: i32) -> (i32, i32) {
    %c0_i32 = arith.constant 0 : i32
    %c0_i32_0 = arith.constant 0 : i32
    %c0_i32_1 = arith.constant 0 : i32
    return %c0_i32, %c0_i32_0 : i32, i32
  }
  func.func @transform_7(%arg0: i32) -> (i32, i32) {
    %c0_i32 = arith.constant 0 : i32
    %c0_i32_0 = arith.constant 0 : i32
    %c0_i32_1 = arith.constant 0 : i32
    return %c0_i32, %c0_i32_0 : i32, i32
  }
  func.func @transform_8(%arg0: i32) -> (i32, i32) {
    %c0_i32 = arith.constant 0 : i32
    %c0_i32_0 = arith.constant 0 : i32
    %c0_i32_1 = arith.constant 0 : i32
    return %c0_i32, %c0_i32_0 : i32, i32
  }
  func.func @transform_9(%arg0: i32) -> (i32, i32) {
    %c0_i32 = arith.constant 0 : i32
    %c0_i32_0 = arith.constant 0 : i32
    %c0_i32_1 = arith.constant 0 : i32
    return %c0_i32, %c0_i32_0 : i32, i32
  }
  func.func @transform_10(%arg0: i32) -> (i32, i32) {
    %c0_i32 = arith.constant 0 : i32
    %c0_i32_0 = arith.constant 0 : i32
    %c0_i32_1 = arith.constant 0 : i32
    return %c0_i32, %c0_i32_0 : i32, i32
  }
  func.func @transform_11(%arg0: i32) -> (i32, i32) {
    %c0_i32 = arith.constant 0 : i32
    %c0_i32_0 = arith.constant 0 : i32
    %c0_i32_1 = arith.constant 0 : i32
    return %c0_i32, %c0_i32_0 : i32, i32
  }
  func.func @transform_12(%arg0: i32) -> (i32, i32) {
    %c0_i32 = arith.constant 0 : i32
    %c0_i32_0 = arith.constant 0 : i32
    %c0_i32_1 = arith.constant 0 : i32
    return %c0_i32, %c0_i32_0 : i32, i32
  }
  func.func @transform_13(%arg0: i32) -> (i32, i32) {
    %c0_i32 = arith.constant 0 : i32
    %c0_i32_0 = arith.constant 0 : i32
    %c0_i32_1 = arith.constant 0 : i32
    return %c0_i32, %c0_i32_0 : i32, i32
  }
}

</mosaic_0001>

<llo_original>
// kernel: tpu_custom_call.1
$region0: #{tpu_custom_call.1}
  #allocation0 [shape = 'u32[]', space=smem, size = 0x4, offset = 0x4, fixed_abs, tag = 'smem constant byte address 0x4 - core index']
  #allocation1 [shape = 'u32[72,128]{1,0:T(1,128)}', space=vmem, size = 0x9000, scoped, tag = 'internal scratch']
  #allocation2 [shape = 'bf16[256,128]{1,0:T(8,128)(2,1)}', space=vmem, size = 0x10000, scoped, tag = 'scratch operand']
  #allocation3 [shape = 'bf16[256,128]{1,0:T(8,128)(2,1)}', space=vmem, size = 0x10000, scoped, tag = 'scratch operand']
  %s0 = inlined_call_operand.vmem [shape: bf16[256,256], index: 0, kind: input, shape index: {}]
  %s1 = inlined_call_operand.vmem [shape: f32[256,1], index: 1, kind: input, shape index: {}]
  %s2 = inlined_call_operand.hbm [shape: bf16[256,128], index: 2, kind: input, shape index: {}]
  %s3 = inlined_call_operand.hbm [shape: bf16[128,128], index: 3, kind: input, shape index: {}]
  %s4 = inlined_call_operand.vmem [shape: bf16[1,128], index: 4, kind: input, shape index: {}]
  %s5 = inlined_call_operand.hbm [shape: bf16[128,128], index: 5, kind: input, shape index: {}]
  %s6 = inlined_call_operand.vmem [shape: bf16[1,128], index: 6, kind: input, shape index: {}]
  %s7 = inlined_call_operand.hbm [shape: bf16[128,128], index: 7, kind: input, shape index: {}]
  %s8 = inlined_call_operand.hbm [shape: bf16[128,128], index: 8, kind: input, shape index: {}]
  %s9 = inlined_call_operand.vmem [shape: bf16[1,128], index: 9, kind: input, shape index: {}]
  %s10 = inlined_call_operand.hbm [shape: bf16[128,128], index: 10, kind: input, shape index: {}]
  %s11 = inlined_call_operand.hbm [shape: bf16[128,128], index: 11, kind: input, shape index: {}]
  %s12 = inlined_call_operand.vmem [shape: bf16[1,128], index: 12, kind: input, shape index: {}]
  %s13 = inlined_call_operand.hbm [shape: f32[256,128], index: 13, kind: output, shape index: {}]
  %s14 = sld [smem:[#allocation0]]
  $region111: #{tpu_custom_call.1} parent=0
    _
  %s16 = ssub.s32 1, %s14
  %s17 = scalar_select 0, %s16, %s14
  $region1: #{tpu_custom_call.1} parent=0
    #allocation4 [shape = 'u8[65536]{0}', space=vmem, size = 0x10000, scoped, tag = 'input window, operand 2, single buffered']
    #allocation5 [shape = 's32[1]{0}', space=sflag, size = 0x4, scoped, tag = 'scoped memory for tpu_custom_call.1']
    #allocation6 [shape = 's32[1]{0}', space=sflag, size = 0x4, scoped, tag = 'scoped memory for tpu_custom_call.1']
    #allocation7 [shape = 'u8[32768]{0}', space=vmem, size = 0x8000, scoped, tag = 'input window, operand 3, single buffered']
    #allocation8 [shape = 's32[1]{0}', space=sflag, size = 0x4, scoped, tag = 'scoped memory for tpu_custom_call.1']
    #allocation9 [shape = 'u8[32768]{0}', space=vmem, size = 0x8000, scoped, tag = 'input window, operand 5, single buffered']
    #allocation10 [shape = 'u8[32768]{0}', space=vmem, size = 0x8000, scoped, tag = 'input window, operand 7, single buffered']
    #allocation11 [shape = 's32[1]{0}', space=sflag, size = 0x4, scoped, tag = 'scoped memory for tpu_custom_call.1']
    #allocation12 [shape = 'u8[32768]{0}', space=vmem, size = 0x8000, scoped, tag = 'input window, operand 8, single buffered']
    #allocation13 [shape = 'u8[32768]{0}', space=vmem, size = 0x8000, scoped, tag = 'input window, operand 10, single buffered']
    #allocation14 [shape = 's32[1]{0}', space=sflag, size = 0x4, scoped, tag = 'scoped memory for tpu_custom_call.1']
    #allocation15 [shape = 'u8[32768]{0}', space=vmem, size = 0x8000, scoped, tag = 'input window, operand 11, single buffered']
    #allocation16 [shape = 'u8[131072]{0}', space=vmem, size = 0x20000, scoped, tag = 'output window, operand 0, single buffered']
    %18 = vsyncpa [#allocation5], 0
    %19 = vsyncpa [#allocation8], 0
    %20 = vsyncpa [#allocation11], 0
    %21 = vsyncpa [#allocation14], 0
    %22 = vsyncpa [#allocation6], 0
    // Predicated region
    $region2: #{tpu_custom_call.1} parent=1 // pred_check
      _
    $region3: #{tpu_custom_call.1} parent=1 // pred_check_branch
      %24 = sbr.rel (0) target = $region5
    $region4: #{tpu_custom_call.1} parent=1 // pred_region
      _
    $region5: #{tpu_custom_call.1} parent=1 // pred_fallthru
      _
    // Predicated region
    $region6: #{tpu_custom_call.1} parent=1 // pred_check
      _
    $region7: #{tpu_custom_call.1} parent=1 // pred_check_branch
      %26 = sbr.rel (0) target = $region9
    $region8: #{tpu_custom_call.1} parent=1 // pred_region
      _
    $region9: #{tpu_custom_call.1} parent=1 // pred_fallthru
      _
    // Predicated region
    $region10: #{tpu_custom_call.1} parent=1 // pred_check
      _
    $region11: #{tpu_custom_call.1} parent=1 // pred_check_branch
      %28 = sbr.rel (0) target = $region13
    $region12: #{tpu_custom_call.1} parent=1 // pred_region
      %30 = vsyncadd [#allocation5], 0
      %s31 = sshll.u32 %s2, 4
      %s32 = int_to_ptr.hbm [resolvable:$true] %s31
      %s33 = sshll.u32 [#allocation4], 4
      %s34 = int_to_ptr.vmem [resolvable:$true] %s33
      %39 = dma.hbm_to_vmem [thread:$0]  %s32, 2048, %s34, [#allocation5], 64, 64, 4
    $region13: #{tpu_custom_call.1} parent=1 // pred_fallthru
      _
    // Predicated region
    $region14: #{tpu_custom_call.1} parent=1 // pred_check
      _
    $region15: #{tpu_custom_call.1} parent=1 // pred_check_branch
      %41 = sbr.rel (0) target = $region17
    $region16: #{tpu_custom_call.1} parent=1 // pred_region
      %43 = vsyncadd [#allocation8], 0
      %s44 = sshll.u32 %s3, 4
      %s45 = int_to_ptr.hbm [resolvable:$true] %s44
      %s46 = sshll.u32 [#allocation7], 4
      %s47 = int_to_ptr.vmem [resolvable:$true] %s46
      %52 = dma.hbm_to_vmem [thread:$0]  %s45, 1024, %s47, [#allocation8], 64, 64, 4
    $region17: #{tpu_custom_call.1} parent=1 // pred_fallthru
      _
    // Predicated region
    $region18: #{tpu_custom_call.1} parent=1 // pred_check
      _
    $region19: #{tpu_custom_call.1} parent=1 // pred_check_branch
      %54 = sbr.rel (0) target = $region21
    $region20: #{tpu_custom_call.1} parent=1 // pred_region
      _
    $region21: #{tpu_custom_call.1} parent=1 // pred_fallthru
      _
    // Predicated region
    $region22: #{tpu_custom_call.1} parent=1 // pred_check
      _
    $region23: #{tpu_custom_call.1} parent=1 // pred_check_branch
      %56 = sbr.rel (0) target = $region25
    $region24: #{tpu_custom_call.1} parent=1 // pred_region
      %58 = vsyncadd [#allocation8], 0
      %s59 = sshll.u32 %s5, 4
      %s60 = int_to_ptr.hbm [resolvable:$true] %s59
      %s61 = sshll.u32 [#allocation9], 4
      %s62 = int_to_ptr.vmem [resolvable:$true] %s61
      %67 = dma.hbm_to_vmem [thread:$0]  %s60, 1024, %s62, [#allocation8], 64, 64, 4
    $region25: #{tpu_custom_call.1} parent=1 // pred_fallthru
      _
    // Predicated region
    $region26: #{tpu_custom_call.1} parent=1 // pred_check
      _
    $region27: #{tpu_custom_call.1} parent=1 // pred_check_branch
      %69 = sbr.rel (0) target = $region29
    $region28: #{tpu_custom_call.1} parent=1 // pred_region
      _
    $region29: #{tpu_custom_call.1} parent=1 // pred_fallthru
      _
    // Predicated region
    $region30: #{tpu_custom_call.1} parent=1 // pred_check
      _
    $region31: #{tpu_custom_call.1} parent=1 // pred_check_branch
      %71 = sbr.rel (0) target = $region33
    $region32: #{tpu_custom_call.1} parent=1 // pred_region
      %73 = vsyncadd [#allocation11], 0
      %s74 = sshll.u32 %s7, 4
      %s75 = int_to_ptr.hbm [resolvable:$true] %s74
      %s76 = sshll.u32 [#allocation10], 4
      %s77 = int_to_ptr.vmem [resolvable:$true] %s76
      %82 = dma.hbm_to_vmem [thread:$0]  %s75, 1024, %s77, [#allocation11], 64, 64, 4
    $region33: #{tpu_custom_call.1} parent=1 // pred_fallthru
      _
    // Predicated region
    $region34: #{tpu_custom_call.1} parent=1 // pred_check
      _
    $region35: #{tpu_custom_call.1} parent=1 // pred_check_branch
      %84 = sbr.rel (0) target = $region37
    $region36: #{tpu_custom_call.1} parent=1 // pred_region
      %86 = vsyncadd [#allocation11], 0
      %s87 = sshll.u32 %s8, 4
      %s88 = int_to_ptr.hbm [resolvable:$true] %s87
      %s89 = sshll.u32 [#allocation12], 4
      %s90 = int_to_ptr.vmem [resolvable:$true] %s89
      %95 = dma.hbm_to_vmem [thread:$0]  %s88, 1024, %s90, [#allocation11], 64, 64, 4
    $region37: #{tpu_custom_call.1} parent=1 // pred_fallthru
      _
    // Predicated region
    $region38: #{tpu_custom_call.1} parent=1 // pred_check
      _
    $region39: #{tpu_custom_call.1} parent=1 // pred_check_branch
      %97 = sbr.rel (0) target = $region41
    $region40: #{tpu_custom_call.1} parent=1 // pred_region
      _
    $region41: #{tpu_custom_call.1} parent=1 // pred_fallthru
      _
    // Predicated region
    $region42: #{tpu_custom_call.1} parent=1 // pred_check
      _
    $region43: #{tpu_custom_call.1} parent=1 // pred_check_branch
      %99 = sbr.rel (0) target = $region45
    $region44: #{tpu_custom_call.1} parent=1 // pred_region
      %101 = vsyncadd [#allocation14], 0
      %s102 = sshll.u32 %s10, 4
      %s103 = int_to_ptr.hbm [resolvable:$true] %s102
      %s104 = sshll.u32 [#allocation13], 4
      %s105 = int_to_ptr.vmem [resolvable:$true] %s104
      %110 = dma.hbm_to_vmem [thread:$0]  %s103, 1024, %s105, [#allocation14], 64, 64, 4
    $region45: #{tpu_custom_call.1} parent=1 // pred_fallthru
      _
    // Predicated region
    $region46: #{tpu_custom_call.1} parent=1 // pred_check
      _
    $region47: #{tpu_custom_call.1} parent=1 // pred_check_branch
      %112 = sbr.rel (0) target = $region49
    $region48: #{tpu_custom_call.1} parent=1 // pred_region
      %114 = vsyncadd [#allocation14], 0
      %s115 = sshll.u32 %s11, 4
      %s116 = int_to_ptr.hbm [resolvable:$true] %s115
      %s117 = sshll.u32 [#allocation15], 4
      %s118 = int_to_ptr.vmem [resolvable:$true] %s117
      %123 = dma.hbm_to_vmem [thread:$0]  %s116, 1024, %s118, [#allocation14], 64, 64, 4
    $region49: #{tpu_custom_call.1} parent=1 // pred_fallthru
      _
    // Predicated region
    $region50: #{tpu_custom_call.1} parent=1 // pred_check
      _
    $region51: #{tpu_custom_call.1} parent=1 // pred_check_branch
      %125 = sbr.rel (0) target = $region53
    $region52: #{tpu_custom_call.1} parent=1 // pred_region
      _
    $region53: #{tpu_custom_call.1} parent=1 // pred_fallthru
      _
    // Predicated region
    $region54: #{tpu_custom_call.1} parent=1 // pred_check
      _
    $region55: #{tpu_custom_call.1} parent=1 // pred_check_branch
      %127 = sbr.rel (0) target = $region57
    $region56: #{tpu_custom_call.1} parent=1 // pred_region
      %129 = dma.done [#allocation5], 2048
    $region57: #{tpu_custom_call.1} parent=1 // pred_fallthru
      _
    // Predicated region
    $region58: #{tpu_custom_call.1} parent=1 // pred_check
      _
    $region59: #{tpu_custom_call.1} parent=1 // pred_check_branch
      %131 = sbr.rel (0) target = $region61
    $region60: #{tpu_custom_call.1} parent=1 // pred_region
      %133 = dma.done [#allocation8], 1024
    $region61: #{tpu_custom_call.1} parent=1 // pred_fallthru
      _
    // Predicated region
    $region62: #{tpu_custom_call.1} parent=1 // pred_check
      _
    $region63: #{tpu_custom_call.1} parent=1 // pred_check_branch
      %135 = sbr.rel (0) target = $region65
    $region64: #{tpu_custom_call.1} parent=1 // pred_region
      %137 = dma.done [#allocation8], 1024
    $region65: #{tpu_custom_call.1} parent=1 // pred_fallthru
      _
    // Predicated region
    $region66: #{tpu_custom_call.1} parent=1 // pred_check
      _
    $region67: #{tpu_custom_call.1} parent=1 // pred_check_branch
      %139 = sbr.rel (0) target = $region69
    $region68: #{tpu_custom_call.1} parent=1 // pred_region
      %141 = dma.done [#allocation11], 1024
    $region69: #{tpu_custom_call.1} parent=1 // pred_fallthru
      _
    // Predicated region
    $region70: #{tpu_custom_call.1} parent=1 // pred_check
      _
    $region71: #{tpu_custom_call.1} parent=1 // pred_check_branch
      %143 = sbr.rel (0) target = $region73
    $region72: #{tpu_custom_call.1} parent=1 // pred_region
      %145 = dma.done [#allocation11], 1024
    $region73: #{tpu_custom_call.1} parent=1 // pred_fallthru
      _
    // Predicated region
    $region74: #{tpu_custom_call.1} parent=1 // pred_check
      _
    $region75: #{tpu_custom_call.1} parent=1 // pred_check_branch
      %147 = sbr.rel (0) target = $region77
    $region76: #{tpu_custom_call.1} parent=1 // pred_region
      %149 = dma.done [#allocation14], 1024
    $region77: #{tpu_custom_call.1} parent=1 // pred_fallthru
      _
    // Predicated region
    $region78: #{tpu_custom_call.1} parent=1 // pred_check
      _
    $region79: #{tpu_custom_call.1} parent=1 // pred_check_branch
      %151 = sbr.rel (0) target = $region81
    $region80: #{tpu_custom_call.1} parent=1 // pred_region
      %153 = dma.done [#allocation14], 1024
    $region81: #{tpu_custom_call.1} parent=1 // pred_fallthru
      _
    loop: start=0, step=1, limit=2
    $region82: #{tpu_custom_call.1} parent=1 // loop_pre_header
      _
    $region83: #{tpu_custom_call.1} parent=1 // loop_header
      %s155 = sphi 0, %s159
      %p156 = scmp.ge.s32.totalorder %s155, 2
    $region84: #{tpu_custom_call.1} parent=1 // loop_header_branch
      %158 = sbr.rel (%p156) target = $region88
    $region85: #{tpu_custom_call.1} parent=1 // loop_body
      %s160 = smul.u32 %s155, 128
      %s161 = sshra.s32 %s160, 3
      %s162 = sand.u32 %s160, 7
      %s163 = smul.addr %s161, 4
      %s164 = scalar_lea.vmem [#allocation4], %s163
      %v165 = vld [vmem:[%s164] sm:$0xf]
      %v166 = vld [vmem:[%s164 + $0x4] sm:$0xf]
      %v167 = vld [vmem:[%s164 + $0x8] sm:$0xf]
      %v168 = vld [vmem:[%s164 + $0xc] sm:$0xf]
      %v169 = vld [vmem:[%s164 + $0x10] sm:$0xf]
      %v170 = vld [vmem:[%s164 + $0x14] sm:$0xf]
      %v171 = vld [vmem:[%s164 + $0x18] sm:$0xf]
      %v172 = vld [vmem:[%s164 + $0x1c] sm:$0xf]
      %v173 = vld [vmem:[%s164 + $0x20] sm:$0xf]
      %v174 = vld [vmem:[%s164 + $0x24] sm:$0xf]
      %v175 = vld [vmem:[%s164 + $0x28] sm:$0xf]
      %v176 = vld [vmem:[%s164 + $0x2c] sm:$0xf]
      %v177 = vld [vmem:[%s164 + $0x30] sm:$0xf]
      %v178 = vld [vmem:[%s164 + $0x34] sm:$0xf]
      %v179 = vld [vmem:[%s164 + $0x38] sm:$0xf]
      %v180 = vld [vmem:[%s164 + $0x3c] sm:$0xf]
      %v181 = vld [vmem:[#allocation7] sm:$0xf]
      %v182 = vld [vmem:[#allocation7 + $0x4] sm:$0xf]
      %v183 = vld [vmem:[#allocation7 + $0x8] sm:$0xf]
      %v184 = vld [vmem:[#allocation7 + $0xc] sm:$0xf]
      %v185 = vld [vmem:[#allocation7 + $0x10] sm:$0xf]
      %v186 = vld [vmem:[#allocation7 + $0x14] sm:$0xf]
      %v187 = vld [vmem:[#allocation7 + $0x18] sm:$0xf]
      %v188 = vld [vmem:[#allocation7 + $0x1c] sm:$0xf]
      %v189 = vld [vmem:[#allocation7 + $0x20] sm:$0xf]
      %v190 = vld [vmem:[#allocation7 + $0x24] sm:$0xf]
      %v191 = vld [vmem:[#allocation7 + $0x28] sm:$0xf]
      %v192 = vld [vmem:[#allocation7 + $0x2c] sm:$0xf]
      %v193 = vld [vmem:[#allocation7 + $0x30] sm:$0xf]
      %v194 = vld [vmem:[#allocation7 + $0x34] sm:$0xf]
      %v195 = vld [vmem:[#allocation7 + $0x38] sm:$0xf]
      %v196 = vld [vmem:[#allocation7 + $0x3c] sm:$0xf]
      %v197 = vld [vmem:[%s4] sm:$0x1]
      %v198 = vunpack.c.l.bf16 %v197
      %v199 = vperm.slane %v198, 0
      %v216 = vunpack.c.l.b16 %v165
      %v217 = vunpack.c.l.b16 %v166
      %v218 = vunpack.c.l.b16 %v167
      %v219 = vunpack.c.l.b16 %v168
      %v220 = vunpack.c.l.b16 %v169
      %v221 = vunpack.c.l.b16 %v170
      %v222 = vunpack.c.l.b16 %v171
      %v223 = vunpack.c.l.b16 %v172
      %v224 = vunpack.c.l.b16 %v173
      %v225 = vunpack.c.l.b16 %v174
      %v226 = vunpack.c.l.b16 %v175
      %v227 = vunpack.c.l.b16 %v176
      %v228 = vunpack.c.l.b16 %v177
      %v229 = vunpack.c.l.b16 %v178
      %v230 = vunpack.c.l.b16 %v179
      %v231 = vunpack.c.l.b16 %v180
      %v232 = vpack.c.b16 %v217, %v216
      %v233 = vpack.c.b16 %v219, %v218
      %v234 = vpack.c.b16 %v221, %v220
      %v235 = vpack.c.b16 %v223, %v222
      %v236 = vpack.c.b16 %v225, %v224
      %v237 = vpack.c.b16 %v227, %v226
      %v238 = vpack.c.b16 %v229, %v228
      %v239 = vpack.c.b16 %v231, %v230
      %v264 = vunpack.c.l.b16 %v181
      %v265 = vunpack.c.l.b16 %v182
      %v266 = vunpack.c.l.b16 %v183
      %v267 = vunpack.c.l.b16 %v184
      %v268 = vunpack.c.l.b16 %v185
      %v269 = vunpack.c.l.b16 %v186
      %v270 = vunpack.c.l.b16 %v187
      %v271 = vunpack.c.l.b16 %v188
      %v272 = vunpack.c.l.b16 %v189
      %v273 = vunpack.c.l.b16 %v190
      %v274 = vunpack.c.l.b16 %v191
      %v275 = vunpack.c.l.b16 %v192
      %v276 = vunpack.c.l.b16 %v193
      %v277 = vunpack.c.l.b16 %v194
      %v278 = vunpack.c.l.b16 %v195
      %v279 = vunpack.c.l.b16 %v196
      %v280 = vpack.c.b16 %v265, %v264
      %v281 = vpack.c.b16 %v267, %v266
      %v282 = vpack.c.b16 %v269, %v268
      %v283 = vpack.c.b16 %v271, %v270
      %v284 = vpack.c.b16 %v273, %v272
      %v285 = vpack.c.b16 %v275, %v274
      %v286 = vpack.c.b16 %v277, %v276
      %v287 = vpack.c.b16 %v279, %v278
      %296 = vmatpush.bf16.msra.mxu0 %v287
      %297 = vmatpush.bf16.msra.mxu0 %v286
      %298 = vmatpush.bf16.msra.mxu0 %v285
      %299 = vmatpush.bf16.msra.mxu0 %v284
      %300 = vmatpush.bf16.msra.mxu0 %v283
      %301 = vmatpush.bf16.msra.mxu0 %v282
      %302 = vmatpush.bf16.msra.mxu0 %v281
      %303 = vmatpush.bf16.msra.mxu0 %v280
      %304 = vmatmul.bf16.gmra.mxu0 %v232
      %v305 = vpop.f32.mrf.mxu0
      %v306 = vadd.f32 %v199, %v305
      %v307 = vpop.f32.mrf.mxu0
      %v308 = vadd.f32 %v199, %v307
      %309 = vmatmul.bf16.gmra.mxu0 %v233
      %v310 = vpop.f32.mrf.mxu0
      %v311 = vadd.f32 %v199, %v310
      %v312 = vpop.f32.mrf.mxu0
      %v313 = vadd.f32 %v199, %v312
      %314 = vmatmul.bf16.gmra.mxu0 %v234
      %v315 = vpop.f32.mrf.mxu0
      %v316 = vadd.f32 %v199, %v315
      %v317 = vpop.f32.mrf.mxu0
      %v318 = vadd.f32 %v199, %v317
      %319 = vmatmul.bf16.gmra.mxu0 %v235
      %v320 = vpop.f32.mrf.mxu0
      %v321 = vadd.f32 %v199, %v320
      %v322 = vpop.f32.mrf.mxu0
      %v323 = vadd.f32 %v199, %v322
      %324 = vmatmul.bf16.gmra.mxu0 %v236
      %v325 = vpop.f32.mrf.mxu0
      %v326 = vadd.f32 %v199, %v325
      %v327 = vpop.f32.mrf.mxu0
      %v328 = vadd.f32 %v199, %v327
      %329 = vmatmul.bf16.gmra.mxu0 %v237
      %v330 = vpop.f32.mrf.mxu0
      %v331 = vadd.f32 %v199, %v330
      %v332 = vpop.f32.mrf.mxu0
      %v333 = vadd.f32 %v199, %v332
      %334 = vmatmul.bf16.gmra.mxu0 %v238
      %v335 = vpop.f32.mrf.mxu0
      %v336 = vadd.f32 %v199, %v335
      %v337 = vpop.f32.mrf.mxu0
      %v338 = vadd.f32 %v199, %v337
      %339 = vmatmul.bf16.gmra.mxu0 %v239
      %v340 = vpop.f32.mrf.mxu0
      %v341 = vadd.f32 %v199, %v340
      %v342 = vpop.f32.mrf.mxu0
      %v343 = vadd.f32 %v199, %v342
      %344 = vdwg.mxu0
      %v345 = vmax.f32 %v306, 0.0
      %v346 = vmax.f32 %v308, 0.0
      %v347 = vmax.f32 %v311, 0.0
      %v348 = vmax.f32 %v313, 0.0
      %v349 = vmax.f32 %v316, 0.0
      %v350 = vmax.f32 %v318, 0.0
      %v351 = vmax.f32 %v321, 0.0
      %v352 = vmax.f32 %v323, 0.0
      %v353 = vmax.f32 %v326, 0.0
      %v354 = vmax.f32 %v328, 0.0
      %v355 = vmax.f32 %v331, 0.0
      %v356 = vmax.f32 %v333, 0.0
      %v357 = vmax.f32 %v336, 0.0
      %v358 = vmax.f32 %v338, 0.0
      %v359 = vmax.f32 %v341, 0.0
      %v360 = vmax.f32 %v343, 0.0
      %v361 = vpack.c.bf16 %v345, %v345
      %v362 = vpack.c.bf16 %v346, %v346
      %v363 = vpack.c.bf16 %v347, %v347
      %v364 = vpack.c.bf16 %v348, %v348
      %v365 = vpack.c.bf16 %v349, %v349
      %v366 = vpack.c.bf16 %v350, %v350
      %v367 = vpack.c.bf16 %v351, %v351
      %v368 = vpack.c.bf16 %v352, %v352
      %v369 = vpack.c.bf16 %v353, %v353
      %v370 = vpack.c.bf16 %v354, %v354
      %v371 = vpack.c.bf16 %v355, %v355
      %v372 = vpack.c.bf16 %v356, %v356
      %v373 = vpack.c.bf16 %v357, %v357
      %v374 = vpack.c.bf16 %v358, %v358
      %v375 = vpack.c.bf16 %v359, %v359
      %v376 = vpack.c.bf16 %v360, %v360
      %s377 = smul.addr %s161, 4
      %s378 = scalar_lea.vmem [#allocation2], %s377
      %379 = vst [vmem:[%s378] sm:$0xf] %v361
      %380 = vst [vmem:[%s378 + $0x4] sm:$0xf] %v362
      %381 = vst [vmem:[%s378 + $0x8] sm:$0xf] %v363
      %382 = vst [vmem:[%s378 + $0xc] sm:$0xf] %v364
      %383 = vst [vmem:[%s378 + $0x10] sm:$0xf] %v365
      %384 = vst [vmem:[%s378 + $0x14] sm:$0xf] %v366
      %385 = vst [vmem:[%s378 + $0x18] sm:$0xf] %v367
      %386 = vst [vmem:[%s378 + $0x1c] sm:$0xf] %v368
      %387 = vst [vmem:[%s378 + $0x20] sm:$0xf] %v369
      %388 = vst [vmem:[%s378 + $0x24] sm:$0xf] %v370
      %389 = vst [vmem:[%s378 + $0x28] sm:$0xf] %v371
      %390 = vst [vmem:[%s378 + $0x2c] sm:$0xf] %v372
      %391 = vst [vmem:[%s378 + $0x30] sm:$0xf] %v373
      %392 = vst [vmem:[%s378 + $0x34] sm:$0xf] %v374
      %393 = vst [vmem:[%s378 + $0x38] sm:$0xf] %v375
      %394 = vst [vmem:[%s378 + $0x3c] sm:$0xf] %v376
    $region86: #{tpu_custom_call.1} parent=1 // loop_footer
      %s159 = sadd.s32 1, %s155
    $region87: #{tpu_custom_call.1} parent=1 // loop_footer_branch
      %154 = sbr.rel target = $region83
    $region88: #{tpu_custom_call.1} parent=1 // loop_exit
      _
    loop: start=0, step=1, limit=2
    $region89: #{tpu_custom_call.1} parent=1 // loop_pre_header
      _
    $region90: #{tpu_custom_call.1} parent=1 // loop_header
      %s396 = sphi 0, %s400
      %p397 = scmp.ge.s32.totalorder %s396, 2
    $region91: #{tpu_custom_call.1} parent=1 // loop_header_branch
      %399 = sbr.rel (%p397) target = $region95
    $region92: #{tpu_custom_call.1} parent=1 // loop_body
      %s401 = smul.u32 %s396, 128
      %s402 = sshra.s32 %s401, 3
      %s403 = sand.u32 %s401, 7
      %s404 = smul.u32 %s402, 2
      %s405 = smul.addr %s404, 4
      %s406 = scalar_lea.vmem %s0, %s405
      %v407 = vld [vmem:[%s406] sm:$0xff]
      %v408 = vld [vmem:[%s406 + $0x8] sm:$0xff]
      %v409 = vld [vmem:[%s406 + $0x10] sm:$0xff]
      %v410 = vld [vmem:[%s406 + $0x18] sm:$0xff]
      %v411 = vld [vmem:[%s406 + $0x20] sm:$0xff]
      %v412 = vld [vmem:[%s406 + $0x28] sm:$0xff]
      %v413 = vld [vmem:[%s406 + $0x30] sm:$0xff]
      %v414 = vld [vmem:[%s406 + $0x38] sm:$0xff]
      %v415 = vld [vmem:[%s406 + $0x40] sm:$0xff]
      %v416 = vld [vmem:[%s406 + $0x48] sm:$0xff]
      %v417 = vld [vmem:[%s406 + $0x50] sm:$0xff]
      %v418 = vld [vmem:[%s406 + $0x58] sm:$0xff]
      %v419 = vld [vmem:[%s406 + $0x60] sm:$0xff]
      %v420 = vld [vmem:[%s406 + $0x68] sm:$0xff]
      %v421 = vld [vmem:[%s406 + $0x70] sm:$0xff]
      %v422 = vld [vmem:[%s406 + $0x78] sm:$0xff]
      %v423 = vld [vmem:[#allocation2] sm:$0xf]
      %v424 = vld [vmem:[#allocation2 + $0x4] sm:$0xf]
      %v425 = vld [vmem:[#allocation2 + $0x8] sm:$0xf]
      %v426 = vld [vmem:[#allocation2 + $0xc] sm:$0xf]
      %v427 = vld [vmem:[#allocation2 + $0x10] sm:$0xf]
      %v428 = vld [vmem:[#allocation2 + $0x14] sm:$0xf]
      %v429 = vld [vmem:[#allocation2 + $0x18] sm:$0xf]
      %v430 = vld [vmem:[#allocation2 + $0x1c] sm:$0xf]
      %v431 = vld [vmem:[#allocation2 + $0x20] sm:$0xf]
      %v432 = vld [vmem:[#allocation2 + $0x24] sm:$0xf]
      %v433 = vld [vmem:[#allocation2 + $0x28] sm:$0xf]
      %v434 = vld [vmem:[#allocation2 + $0x2c] sm:$0xf]
      %v435 = vld [vmem:[#allocation2 + $0x30] sm:$0xf]
      %v436 = vld [vmem:[#allocation2 + $0x34] sm:$0xf]
      %v437 = vld [vmem:[#allocation2 + $0x38] sm:$0xf]
      %v438 = vld [vmem:[#allocation2 + $0x3c] sm:$0xf]
      %v439 = vld [vmem:[#allocation2 + $0x40] sm:$0xf]
      %v440 = vld [vmem:[#allocation2 + $0x44] sm:$0xf]
      %v441 = vld [vmem:[#allocation2 + $0x48] sm:$0xf]
      %v442 = vld [vmem:[#allocation2 + $0x4c] sm:$0xf]
      %v443 = vld [vmem:[#allocation2 + $0x50] sm:$0xf]
      %v444 = vld [vmem:[#allocation2 + $0x54] sm:$0xf]
      %v445 = vld [vmem:[#allocation2 + $0x58] sm:$0xf]
      %v446 = vld [vmem:[#allocation2 + $0x5c] sm:$0xf]
      %v447 = vld [vmem:[#allocation2 + $0x60] sm:$0xf]
      %v448 = vld [vmem:[#allocation2 + $0x64] sm:$0xf]
      %v449 = vld [vmem:[#allocation2 + $0x68] sm:$0xf]
      %v450 = vld [vmem:[#allocation2 + $0x6c] sm:$0xf]
      %v451 = vld [vmem:[#allocation2 + $0x70] sm:$0xf]
      %v452 = vld [vmem:[#allocation2 + $0x74] sm:$0xf]
      %v453 = vld [vmem:[#allocation2 + $0x78] sm:$0xf]
      %v454 = vld [vmem:[#allocation2 + $0x7c] sm:$0xf]
      %v471 = vunpack.c.l.b16 %v407
      %v472 = vunpack.c.h.b16 %v407
      %v473 = vunpack.c.l.b16 %v408
      %v474 = vunpack.c.h.b16 %v408
      %v475 = vunpack.c.l.b16 %v409
      %v476 = vunpack.c.h.b16 %v409
      %v477 = vunpack.c.l.b16 %v410
      %v478 = vunpack.c.h.b16 %v410
      %v479 = vunpack.c.l.b16 %v411
      %v480 = vunpack.c.h.b16 %v411
      %v481 = vunpack.c.l.b16 %v412
      %v482 = vunpack.c.h.b16 %v412
      %v483 = vunpack.c.l.b16 %v413
      %v484 = vunpack.c.h.b16 %v413
      %v485 = vunpack.c.l.b16 %v414
      %v486 = vunpack.c.h.b16 %v414
      %v487 = vunpack.c.l.b16 %v415
      %v488 = vunpack.c.h.b16 %v415
      %v489 = vunpack.c.l.b16 %v416
      %v490 = vunpack.c.h.b16 %v416
      %v491 = vunpack.c.l.b16 %v417
      %v492 = vunpack.c.h.b16 %v417
      %v493 = vunpack.c.l.b16 %v418
      %v494 = vunpack.c.h.b16 %v418
      %v495 = vunpack.c.l.b16 %v419
      %v496 = vunpack.c.h.b16 %v419
      %v497 = vunpack.c.l.b16 %v420
      %v498 = vunpack.c.h.b16 %v420
      %v499 = vunpack.c.l.b16 %v421
      %v500 = vunpack.c.h.b16 %v421
      %v501 = vunpack.c.l.b16 %v422
      %v502 = vunpack.c.h.b16 %v422
      %v503 = vpack.c.b16 %v473, %v471
      %v504 = vpack.c.b16 %v474, %v472
      %v505 = vpack.c.b16 %v477, %v475
      %v506 = vpack.c.b16 %v478, %v476
      %v507 = vpack.c.b16 %v481, %v479
      %v508 = vpack.c.b16 %v482, %v480
      %v509 = vpack.c.b16 %v485, %v483
      %v510 = vpack.c.b16 %v486, %v484
      %v511 = vpack.c.b16 %v489, %v487
      %v512 = vpack.c.b16 %v490, %v488
      %v513 = vpack.c.b16 %v493, %v491
      %v514 = vpack.c.b16 %v494, %v492
      %v515 = vpack.c.b16 %v497, %v495
      %v516 = vpack.c.b16 %v498, %v496
      %v517 = vpack.c.b16 %v501, %v499
      %v518 = vpack.c.b16 %v502, %v500
      %v567 = vunpack.c.l.b16 %v423
      %v568 = vunpack.c.l.b16 %v424
      %v569 = vunpack.c.l.b16 %v425
      %v570 = vunpack.c.l.b16 %v426
      %v571 = vunpack.c.l.b16 %v427
      %v572 = vunpack.c.l.b16 %v428
      %v573 = vunpack.c.l.b16 %v429
      %v574 = vunpack.c.l.b16 %v430
      %v575 = vunpack.c.l.b16 %v431
      %v576 = vunpack.c.l.b16 %v432
      %v577 = vunpack.c.l.b16 %v433
      %v578 = vunpack.c.l.b16 %v434
      %v579 = vunpack.c.l.b16 %v435
      %v580 = vunpack.c.l.b16 %v436
      %v581 = vunpack.c.l.b16 %v437
      %v582 = vunpack.c.l.b16 %v438
      %v583 = vunpack.c.l.b16 %v439
      %v584 = vunpack.c.l.b16 %v440
      %v585 = vunpack.c.l.b16 %v441
      %v586 = vunpack.c.l.b16 %v442
      %v587 = vunpack.c.l.b16 %v443
      %v588 = vunpack.c.l.b16 %v444
      %v589 = vunpack.c.l.b16 %v445
      %v590 = vunpack.c.l.b16 %v446
      %v591 = vunpack.c.l.b16 %v447
      %v592 = vunpack.c.l.b16 %v448
      %v593 = vunpack.c.l.b16 %v449
      %v594 = vunpack.c.l.b16 %v450
      %v595 = vunpack.c.l.b16 %v451
      %v596 = vunpack.c.l.b16 %v452
      %v597 = vunpack.c.l.b16 %v453
      %v598 = vunpack.c.l.b16 %v454
      %v599 = vpack.c.b16 %v568, %v567
      %v600 = vpack.c.b16 %v570, %v569
      %v601 = vpack.c.b16 %v572, %v571
      %v602 = vpack.c.b16 %v574, %v573
      %v603 = vpack.c.b16 %v576, %v575
      %v604 = vpack.c.b16 %v578, %v577
      %v605 = vpack.c.b16 %v580, %v579
      %v606 = vpack.c.b16 %v582, %v581
      %v607 = vpack.c.b16 %v584, %v583
      %v608 = vpack.c.b16 %v586, %v585
      %v609 = vpack.c.b16 %v588, %v587
      %v610 = vpack.c.b16 %v590, %v589
      %v611 = vpack.c.b16 %v592, %v591
      %v612 = vpack.c.b16 %v594, %v593
      %v613 = vpack.c.b16 %v596, %v595
      %v614 = vpack.c.b16 %v598, %v597
      %631 = vmatpush.bf16.msra.mxu0 %v606
      %632 = vmatpush.bf16.msra.mxu0 %v605
      %633 = vmatpush.bf16.msra.mxu0 %v604
      %634 = vmatpush.bf16.msra.mxu0 %v603
      %635 = vmatpush.bf16.msra.mxu0 %v602
      %636 = vmatpush.bf16.msra.mxu0 %v601
      %637 = vmatpush.bf16.msra.mxu0 %v600
      %638 = vmatpush.bf16.msra.mxu0 %v599
      %639 = vmatmul.bf16.gmra.mxu0 %v503
      %v640 = vpop.f32.mrf.mxu0
      %v641 = vadd.f32 0.0, %v640
      %v642 = vpop.f32.mrf.mxu0
      %v643 = vadd.f32 0.0, %v642
      %644 = vmatmul.bf16.gmra.mxu0 %v505
      %v645 = vpop.f32.mrf.mxu0
      %v646 = vadd.f32 0.0, %v645
      %v647 = vpop.f32.mrf.mxu0
      %v648 = vadd.f32 0.0, %v647
      %649 = vmatmul.bf16.gmra.mxu0 %v507
      %v650 = vpop.f32.mrf.mxu0
      %v651 = vadd.f32 0.0, %v650
      %v652 = vpop.f32.mrf.mxu0
      %v653 = vadd.f32 0.0, %v652
      %654 = vmatmul.bf16.gmra.mxu0 %v509
      %v655 = vpop.f32.mrf.mxu0
      %v656 = vadd.f32 0.0, %v655
      %v657 = vpop.f32.mrf.mxu0
      %v658 = vadd.f32 0.0, %v657
      %659 = vmatmul.bf16.gmra.mxu0 %v511
      %v660 = vpop.f32.mrf.mxu0
      %v661 = vadd.f32 0.0, %v660
      %v662 = vpop.f32.mrf.mxu0
      %v663 = vadd.f32 0.0, %v662
      %664 = vmatmul.bf16.gmra.mxu0 %v513
      %v665 = vpop.f32.mrf.mxu0
      %v666 = vadd.f32 0.0, %v665
      %v667 = vpop.f32.mrf.mxu0
      %v668 = vadd.f32 0.0, %v667
      %669 = vmatmul.bf16.gmra.mxu0 %v515
      %v670 = vpop.f32.mrf.mxu0
      %v671 = vadd.f32 0.0, %v670
      %v672 = vpop.f32.mrf.mxu0
      %v673 = vadd.f32 0.0, %v672
      %674 = vmatmul.bf16.gmra.mxu0 %v517
      %v675 = vpop.f32.mrf.mxu0
      %v676 = vadd.f32 0.0, %v675
      %v677 = vpop.f32.mrf.mxu0
      %v678 = vadd.f32 0.0, %v677
      %679 = vdwg.mxu0
      %680 = vmatpush.bf16.msra.mxu0 %v614
      %681 = vmatpush.bf16.msra.mxu0 %v613
      %682 = vmatpush.bf16.msra.mxu0 %v612
      %683 = vmatpush.bf16.msra.mxu0 %v611
      %684 = vmatpush.bf16.msra.mxu0 %v610
      %685 = vmatpush.bf16.msra.mxu0 %v609
      %686 = vmatpush.bf16.msra.mxu0 %v608
      %687 = vmatpush.bf16.msra.mxu0 %v607
      %688 = vmatmul.bf16.gmra.mxu0 %v504
      %v689 = vpop.f32.mrf.mxu0
      %v690 = vadd.f32 %v641, %v689
      %v691 = vpop.f32.mrf.mxu0
      %v692 = vadd.f32 %v643, %v691
      %693 = vmatmul.bf16.gmra.mxu0 %v506
      %v694 = vpop.f32.mrf.mxu0
      %v695 = vadd.f32 %v646, %v694
      %v696 = vpop.f32.mrf.mxu0
      %v697 = vadd.f32 %v648, %v696
      %698 = vmatmul.bf16.gmra.mxu0 %v508
      %v699 = vpop.f32.mrf.mxu0
      %v700 = vadd.f32 %v651, %v699
      %v701 = vpop.f32.mrf.mxu0
      %v702 = vadd.f32 %v653, %v701
      %703 = vmatmul.bf16.gmra.mxu0 %v510
      %v704 = vpop.f32.mrf.mxu0
      %v705 = vadd.f32 %v656, %v704
      %v706 = vpop.f32.mrf.mxu0
      %v707 = vadd.f32 %v658, %v706
      %708 = vmatmul.bf16.gmra.mxu0 %v512
      %v709 = vpop.f32.mrf.mxu0
      %v710 = vadd.f32 %v661, %v709
      %v711 = vpop.f32.mrf.mxu0
      %v712 = vadd.f32 %v663, %v711
      %713 = vmatmul.bf16.gmra.mxu0 %v514
      %v714 = vpop.f32.mrf.mxu0
      %v715 = vadd.f32 %v666, %v714
      %v716 = vpop.f32.mrf.mxu0
      %v717 = vadd.f32 %v668, %v716
      %718 = vmatmul.bf16.gmra.mxu0 %v516
      %v719 = vpop.f32.mrf.mxu0
      %v720 = vadd.f32 %v671, %v719
      %v721 = vpop.f32.mrf.mxu0
      %v722 = vadd.f32 %v673, %v721
      %723 = vmatmul.bf16.gmra.mxu0 %v518
      %v724 = vpop.f32.mrf.mxu0
      %v725 = vadd.f32 %v676, %v724
      %v726 = vpop.f32.mrf.mxu0
      %v727 = vadd.f32 %v678, %v726
      %728 = vdwg.mxu0
      %s729 = scalar_lea.vmem %s1, %s401
      %v730 = vld [vmem:[%s729] sm:$0xff]
      %v731 = vld [vmem:[%s729 + $0x8] sm:$0xff]
      %v732 = vld [vmem:[%s729 + $0x10] sm:$0xff]
      %v733 = vld [vmem:[%s729 + $0x18] sm:$0xff]
      %v734 = vld [vmem:[%s729 + $0x20] sm:$0xff]
      %v735 = vld [vmem:[%s729 + $0x28] sm:$0xff]
      %v736 = vld [vmem:[%s729 + $0x30] sm:$0xff]
      %v737 = vld [vmem:[%s729 + $0x38] sm:$0xff]
      %v738 = vld [vmem:[%s729 + $0x40] sm:$0xff]
      %v739 = vld [vmem:[%s729 + $0x48] sm:$0xff]
      %v740 = vld [vmem:[%s729 + $0x50] sm:$0xff]
      %v741 = vld [vmem:[%s729 + $0x58] sm:$0xff]
      %v742 = vld [vmem:[%s729 + $0x60] sm:$0xff]
      %v743 = vld [vmem:[%s729 + $0x68] sm:$0xff]
      %v744 = vld [vmem:[%s729 + $0x70] sm:$0xff]
      %v745 = vld [vmem:[%s729 + $0x78] sm:$0xff]
      %747 = vset.pattern.permute.xlu0 0
      %748 = vperm.xlu0 %747, %v730
      %v749 = vpop.permute.xlu0 %748
      %752 = vset.pattern.permute.xlu0 0
      %753 = vperm.xlu0 %752, %v731
      %v754 = vpop.permute.xlu0 %753
      %757 = vset.pattern.permute.xlu0 0
      %758 = vperm.xlu0 %757, %v732
      %v759 = vpop.permute.xlu0 %758
      %762 = vset.pattern.permute.xlu0 0
      %763 = vperm.xlu0 %762, %v733
      %v764 = vpop.permute.xlu0 %763
      %767 = vset.pattern.permute.xlu0 0
      %768 = vperm.xlu0 %767, %v734
      %v769 = vpop.permute.xlu0 %768
      %772 = vset.pattern.permute.xlu0 0
      %773 = vperm.xlu0 %772, %v735
      %v774 = vpop.permute.xlu0 %773
      %777 = vset.pattern.permute.xlu0 0
      %778 = vperm.xlu0 %777, %v736
      %v779 = vpop.permute.xlu0 %778
      %782 = vset.pattern.permute.xlu0 0
      %783 = vperm.xlu0 %782, %v737
      %v784 = vpop.permute.xlu0 %783
      %787 = vset.pattern.permute.xlu0 0
      %788 = vperm.xlu0 %787, %v738
      %v789 = vpop.permute.xlu0 %788
      %792 = vset.pattern.permute.xlu0 0
      %793 = vperm.xlu0 %792, %v739
      %v794 = vpop.permute.xlu0 %793
      %797 = vset.pattern.permute.xlu0 0
      %798 = vperm.xlu0 %797, %v740
      %v799 = vpop.permute.xlu0 %798
      %802 = vset.pattern.permute.xlu0 0
      %803 = vperm.xlu0 %802, %v741
      %v804 = vpop.permute.xlu0 %803
      %807 = vset.pattern.permute.xlu0 0
      %808 = vperm.xlu0 %807, %v742
      %v809 = vpop.permute.xlu0 %808
      %812 = vset.pattern.permute.xlu0 0
      %813 = vperm.xlu0 %812, %v743
      %v814 = vpop.permute.xlu0 %813
      %817 = vset.pattern.permute.xlu0 0
      %818 = vperm.xlu0 %817, %v744
      %v819 = vpop.permute.xlu0 %818
      %822 = vset.pattern.permute.xlu0 0
      %823 = vperm.xlu0 %822, %v745
      %v824 = vpop.permute.xlu0 %823
      %v826 = vmul.f32 %v690, %v749
      %v827 = vmul.f32 %v692, %v754
      %v828 = vmul.f32 %v695, %v759
      %v829 = vmul.f32 %v697, %v764
      %v830 = vmul.f32 %v700, %v769
      %v831 = vmul.f32 %v702, %v774
      %v832 = vmul.f32 %v705, %v779
      %v833 = vmul.f32 %v707, %v784
      %v834 = vmul.f32 %v710, %v789
      %v835 = vmul.f32 %v712, %v794
      %v836 = vmul.f32 %v715, %v799
      %v837 = vmul.f32 %v717, %v804
      %v838 = vmul.f32 %v720, %v809
      %v839 = vmul.f32 %v722, %v814
      %v840 = vmul.f32 %v725, %v819
      %v841 = vmul.f32 %v727, %v824
      %v842 = vpack.c.bf16 %v827, %v826
      %v843 = vpack.c.bf16 %v829, %v828
      %v844 = vpack.c.bf16 %v831, %v830
      %v845 = vpack.c.bf16 %v833, %v832
      %v846 = vpack.c.bf16 %v835, %v834
      %v847 = vpack.c.bf16 %v837, %v836
      %v848 = vpack.c.bf16 %v839, %v838
      %v849 = vpack.c.bf16 %v841, %v840
      %v850 = vld [vmem:[#allocation9] sm:$0xf]
      %v851 = vld [vmem:[#allocation9 + $0x4] sm:$0xf]
      %v852 = vld [vmem:[#allocation9 + $0x8] sm:$0xf]
      %v853 = vld [vmem:[#allocation9 + $0xc] sm:$0xf]
      %v854 = vld [vmem:[#allocation9 + $0x10] sm:$0xf]
      %v855 = vld [vmem:[#allocation9 + $0x14] sm:$0xf]
      %v856 = vld [vmem:[#allocation9 + $0x18] sm:$0xf]
      %v857 = vld [vmem:[#allocation9 + $0x1c] sm:$0xf]
      %v858 = vld [vmem:[#allocation9 + $0x20] sm:$0xf]
      %v859 = vld [vmem:[#allocation9 + $0x24] sm:$0xf]
      %v860 = vld [vmem:[#allocation9 + $0x28] sm:$0xf]
      %v861 = vld [vmem:[#allocation9 + $0x2c] sm:$0xf]
      %v862 = vld [vmem:[#allocation9 + $0x30] sm:$0xf]
      %v863 = vld [vmem:[#allocation9 + $0x34] sm:$0xf]
      %v864 = vld [vmem:[#allocation9 + $0x38] sm:$0xf]
      %v865 = vld [vmem:[#allocation9 + $0x3c] sm:$0xf]
      %v866 = vld [vmem:[%s6] sm:$0x1]
      %v867 = vunpack.c.l.bf16 %v866
      %v868 = vperm.slane %v867, 0
      %v885 = vunpack.c.l.b16 %v850
      %v886 = vunpack.c.l.b16 %v851
      %v887 = vunpack.c.l.b16 %v852
      %v888 = vunpack.c.l.b16 %v853
      %v889 = vunpack.c.l.b16 %v854
      %v890 = vunpack.c.l.b16 %v855
      %v891 = vunpack.c.l.b16 %v856
      %v892 = vunpack.c.l.b16 %v857
      %v893 = vunpack.c.l.b16 %v858
      %v894 = vunpack.c.l.b16 %v859
      %v895 = vunpack.c.l.b16 %v860
      %v896 = vunpack.c.l.b16 %v861
      %v897 = vunpack.c.l.b16 %v862
      %v898 = vunpack.c.l.b16 %v863
      %v899 = vunpack.c.l.b16 %v864
      %v900 = vunpack.c.l.b16 %v865
      %v901 = vpack.c.b16 %v886, %v885
      %v902 = vpack.c.b16 %v888, %v887
      %v903 = vpack.c.b16 %v890, %v889
      %v904 = vpack.c.b16 %v892, %v891
      %v905 = vpack.c.b16 %v894, %v893
      %v906 = vpack.c.b16 %v896, %v895
      %v907 = vpack.c.b16 %v898, %v897
      %v908 = vpack.c.b16 %v900, %v899
      %917 = vmatpush.bf16.msra.mxu0 %v908
      %918 = vmatpush.bf16.msra.mxu0 %v907
      %919 = vmatpush.bf16.msra.mxu0 %v906
      %920 = vmatpush.bf16.msra.mxu0 %v905
      %921 = vmatpush.bf16.msra.mxu0 %v904
      %922 = vmatpush.bf16.msra.mxu0 %v903
      %923 = vmatpush.bf16.msra.mxu0 %v902
      %924 = vmatpush.bf16.msra.mxu0 %v901
      %925 = vmatmul.bf16.gmra.mxu0 %v842
      %v926 = vpop.f32.mrf.mxu0
      %v927 = vadd.f32 %v868, %v926
      %v928 = vpop.f32.mrf.mxu0
      %v929 = vadd.f32 %v868, %v928
      %930 = vmatmul.bf16.gmra.mxu0 %v843
      %v931 = vpop.f32.mrf.mxu0
      %v932 = vadd.f32 %v868, %v931
      %v933 = vpop.f32.mrf.mxu0
      %v934 = vadd.f32 %v868, %v933
      %935 = vmatmul.bf16.gmra.mxu0 %v844
      %v936 = vpop.f32.mrf.mxu0
      %v937 = vadd.f32 %v868, %v936
      %v938 = vpop.f32.mrf.mxu0
      %v939 = vadd.f32 %v868, %v938
      %940 = vmatmul.bf16.gmra.mxu0 %v845
      %v941 = vpop.f32.mrf.mxu0
      %v942 = vadd.f32 %v868, %v941
      %v943 = vpop.f32.mrf.mxu0
      %v944 = vadd.f32 %v868, %v943
      %945 = vmatmul.bf16.gmra.mxu0 %v846
      %v946 = vpop.f32.mrf.mxu0
      %v947 = vadd.f32 %v868, %v946
      %v948 = vpop.f32.mrf.mxu0
      %v949 = vadd.f32 %v868, %v948
      %950 = vmatmul.bf16.gmra.mxu0 %v847
      %v951 = vpop.f32.mrf.mxu0
      %v952 = vadd.f32 %v868, %v951
      %v953 = vpop.f32.mrf.mxu0
      %v954 = vadd.f32 %v868, %v953
      %955 = vmatmul.bf16.gmra.mxu0 %v848
      %v956 = vpop.f32.mrf.mxu0
      %v957 = vadd.f32 %v868, %v956
      %v958 = vpop.f32.mrf.mxu0
      %v959 = vadd.f32 %v868, %v958
      %960 = vmatmul.bf16.gmra.mxu0 %v849
      %v961 = vpop.f32.mrf.mxu0
      %v962 = vadd.f32 %v868, %v961
      %v963 = vpop.f32.mrf.mxu0
      %v964 = vadd.f32 %v868, %v963
      %965 = vdwg.mxu0
      %s966 = smul.addr %s402, 4
      %s967 = scalar_lea.vmem [#allocation2], %s966
      %v968 = vld [vmem:[%s967] sm:$0xf]
      %v969 = vld [vmem:[%s967 + $0x4] sm:$0xf]
      %v970 = vld [vmem:[%s967 + $0x8] sm:$0xf]
      %v971 = vld [vmem:[%s967 + $0xc] sm:$0xf]
      %v972 = vld [vmem:[%s967 + $0x10] sm:$0xf]
      %v973 = vld [vmem:[%s967 + $0x14] sm:$0xf]
      %v974 = vld [vmem:[%s967 + $0x18] sm:$0xf]
      %v975 = vld [vmem:[%s967 + $0x1c] sm:$0xf]
      %v976 = vld [vmem:[%s967 + $0x20] sm:$0xf]
      %v977 = vld [vmem:[%s967 + $0x24] sm:$0xf]
      %v978 = vld [vmem:[%s967 + $0x28] sm:$0xf]
      %v979 = vld [vmem:[%s967 + $0x2c] sm:$0xf]
      %v980 = vld [vmem:[%s967 + $0x30] sm:$0xf]
      %v981 = vld [vmem:[%s967 + $0x34] sm:$0xf]
      %v982 = vld [vmem:[%s967 + $0x38] sm:$0xf]
      %v983 = vld [vmem:[%s967 + $0x3c] sm:$0xf]
      %v984 = vld [vmem:[#allocation10] sm:$0xf]
      %v985 = vld [vmem:[#allocation10 + $0x4] sm:$0xf]
      %v986 = vld [vmem:[#allocation10 + $0x8] sm:$0xf]
      %v987 = vld [vmem:[#allocation10 + $0xc] sm:$0xf]
      %v988 = vld [vmem:[#allocation10 + $0x10] sm:$0xf]
      %v989 = vld [vmem:[#allocation10 + $0x14] sm:$0xf]
      %v990 = vld [vmem:[#allocation10 + $0x18] sm:$0xf]
      %v991 = vld [vmem:[#allocation10 + $0x1c] sm:$0xf]
      %v992 = vld [vmem:[#allocation10 + $0x20] sm:$0xf]
      %v993 = vld [vmem:[#allocation10 + $0x24] sm:$0xf]
      %v994 = vld [vmem:[#allocation10 + $0x28] sm:$0xf]
      %v995 = vld [vmem:[#allocation10 + $0x2c] sm:$0xf]
      %v996 = vld [vmem:[#allocation10 + $0x30] sm:$0xf]
      %v997 = vld [vmem:[#allocation10 + $0x34] sm:$0xf]
      %v998 = vld [vmem:[#allocation10 + $0x38] sm:$0xf]
      %v999 = vld [vmem:[#allocation10 + $0x3c] sm:$0xf]
      %v1016 = vunpack.c.l.b16 %v968
      %v1017 = vunpack.c.l.b16 %v969
      %v1018 = vunpack.c.l.b16 %v970
      %v1019 = vunpack.c.l.b16 %v971
      %v1020 = vunpack.c.l.b16 %v972
      %v1021 = vunpack.c.l.b16 %v973
      %v1022 = vunpack.c.l.b16 %v974
      %v1023 = vunpack.c.l.b16 %v975
      %v1024 = vunpack.c.l.b16 %v976
      %v1025 = vunpack.c.l.b16 %v977
      %v1026 = vunpack.c.l.b16 %v978
      %v1027 = vunpack.c.l.b16 %v979
      %v1028 = vunpack.c.l.b16 %v980
      %v1029 = vunpack.c.l.b16 %v981
      %v1030 = vunpack.c.l.b16 %v982
      %v1031 = vunpack.c.l.b16 %v983
      %v1032 = vpack.c.b16 %v1017, %v1016
      %v1033 = vpack.c.b16 %v1019, %v1018
      %v1034 = vpack.c.b16 %v1021, %v1020
      %v1035 = vpack.c.b16 %v1023, %v1022
      %v1036 = vpack.c.b16 %v1025, %v1024
      %v1037 = vpack.c.b16 %v1027, %v1026
      %v1038 = vpack.c.b16 %v1029, %v1028
      %v1039 = vpack.c.b16 %v1031, %v1030
      %v1064 = vunpack.c.l.b16 %v984
      %v1065 = vunpack.c.l.b16 %v985
      %v1066 = vunpack.c.l.b16 %v986
      %v1067 = vunpack.c.l.b16 %v987
      %v1068 = vunpack.c.l.b16 %v988
      %v1069 = vunpack.c.l.b16 %v989
      %v1070 = vunpack.c.l.b16 %v990
      %v1071 = vunpack.c.l.b16 %v991
      %v1072 = vunpack.c.l.b16 %v992
      %v1073 = vunpack.c.l.b16 %v993
      %v1074 = vunpack.c.l.b16 %v994
      %v1075 = vunpack.c.l.b16 %v995
      %v1076 = vunpack.c.l.b16 %v996
      %v1077 = vunpack.c.l.b16 %v997
      %v1078 = vunpack.c.l.b16 %v998
      %v1079 = vunpack.c.l.b16 %v999
      %v1080 = vpack.c.b16 %v1065, %v1064
      %v1081 = vpack.c.b16 %v1067, %v1066
      %v1082 = vpack.c.b16 %v1069, %v1068
      %v1083 = vpack.c.b16 %v1071, %v1070
      %v1084 = vpack.c.b16 %v1073, %v1072
      %v1085 = vpack.c.b16 %v1075, %v1074
      %v1086 = vpack.c.b16 %v1077, %v1076
      %v1087 = vpack.c.b16 %v1079, %v1078
      %1096 = vmatpush.bf16.msra.mxu0 %v1087
      %1097 = vmatpush.bf16.msra.mxu0 %v1086
      %1098 = vmatpush.bf16.msra.mxu0 %v1085
      %1099 = vmatpush.bf16.msra.mxu0 %v1084
      %1100 = vmatpush.bf16.msra.mxu0 %v1083
      %1101 = vmatpush.bf16.msra.mxu0 %v1082
      %1102 = vmatpush.bf16.msra.mxu0 %v1081
      %1103 = vmatpush.bf16.msra.mxu0 %v1080
      %1104 = vmatmul.bf16.gmra.mxu0 %v1032
      %v1105 = vpop.f32.mrf.mxu0
      %v1106 = vadd.f32 0.0, %v1105
      %v1107 = vpop.f32.mrf.mxu0
      %v1108 = vadd.f32 0.0, %v1107
      %1109 = vmatmul.bf16.gmra.mxu0 %v1033
      %v1110 = vpop.f32.mrf.mxu0
      %v1111 = vadd.f32 0.0, %v1110
      %v1112 = vpop.f32.mrf.mxu0
      %v1113 = vadd.f32 0.0, %v1112
      %1114 = vmatmul.bf16.gmra.mxu0 %v1034
      %v1115 = vpop.f32.mrf.mxu0
      %v1116 = vadd.f32 0.0, %v1115
      %v1117 = vpop.f32.mrf.mxu0
      %v1118 = vadd.f32 0.0, %v1117
      %1119 = vmatmul.bf16.gmra.mxu0 %v1035
      %v1120 = vpop.f32.mrf.mxu0
      %v1121 = vadd.f32 0.0, %v1120
      %v1122 = vpop.f32.mrf.mxu0
      %v1123 = vadd.f32 0.0, %v1122
      %1124 = vmatmul.bf16.gmra.mxu0 %v1036
      %v1125 = vpop.f32.mrf.mxu0
      %v1126 = vadd.f32 0.0, %v1125
      %v1127 = vpop.f32.mrf.mxu0
      %v1128 = vadd.f32 0.0, %v1127
      %1129 = vmatmul.bf16.gmra.mxu0 %v1037
      %v1130 = vpop.f32.mrf.mxu0
      %v1131 = vadd.f32 0.0, %v1130
      %v1132 = vpop.f32.mrf.mxu0
      %v1133 = vadd.f32 0.0, %v1132
      %1134 = vmatmul.bf16.gmra.mxu0 %v1038
      %v1135 = vpop.f32.mrf.mxu0
      %v1136 = vadd.f32 0.0, %v1135
      %v1137 = vpop.f32.mrf.mxu0
      %v1138 = vadd.f32 0.0, %v1137
      %1139 = vmatmul.bf16.gmra.mxu0 %v1039
      %v1140 = vpop.f32.mrf.mxu0
      %v1141 = vadd.f32 0.0, %v1140
      %v1142 = vpop.f32.mrf.mxu0
      %v1143 = vadd.f32 0.0, %v1142
      %1144 = vdwg.mxu0
      %v1145 = vadd.f32 %v927, %v1106
      %v1146 = vadd.f32 %v929, %v1108
      %v1147 = vadd.f32 %v932, %v1111
      %v1148 = vadd.f32 %v934, %v1113
      %v1149 = vadd.f32 %v937, %v1116
      %v1150 = vadd.f32 %v939, %v1118
      %v1151 = vadd.f32 %v942, %v1121
      %v1152 = vadd.f32 %v944, %v1123
      %v1153 = vadd.f32 %v947, %v1126
      %v1154 = vadd.f32 %v949, %v1128
      %v1155 = vadd.f32 %v952, %v1131
      %v1156 = vadd.f32 %v954, %v1133
      %v1157 = vadd.f32 %v957, %v1136
      %v1158 = vadd.f32 %v959, %v1138
      %v1159 = vadd.f32 %v962, %v1141
      %v1160 = vadd.f32 %v964, %v1143
      %v1161 = vpack.c.bf16 %v1145, %v1145
      %v1162 = vpack.c.bf16 %v1146, %v1146
      %v1163 = vpack.c.bf16 %v1147, %v1147
      %v1164 = vpack.c.bf16 %v1148, %v1148
      %v1165 = vpack.c.bf16 %v1149, %v1149
      %v1166 = vpack.c.bf16 %v1150, %v1150
      %v1167 = vpack.c.bf16 %v1151, %v1151
      %v1168 = vpack.c.bf16 %v1152, %v1152
      %v1169 = vpack.c.bf16 %v1153, %v1153
      %v1170 = vpack.c.bf16 %v1154, %v1154
      %v1171 = vpack.c.bf16 %v1155, %v1155
      %v1172 = vpack.c.bf16 %v1156, %v1156
      %v1173 = vpack.c.bf16 %v1157, %v1157
      %v1174 = vpack.c.bf16 %v1158, %v1158
      %v1175 = vpack.c.bf16 %v1159, %v1159
      %v1176 = vpack.c.bf16 %v1160, %v1160
      %s1177 = smul.addr %s402, 4
      %s1178 = scalar_lea.vmem [#allocation3], %s1177
      %1179 = vst [vmem:[%s1178] sm:$0xf] %v1161
      %1180 = vst [vmem:[%s1178 + $0x4] sm:$0xf] %v1162
      %1181 = vst [vmem:[%s1178 + $0x8] sm:$0xf] %v1163
      %1182 = vst [vmem:[%s1178 + $0xc] sm:$0xf] %v1164
      %1183 = vst [vmem:[%s1178 + $0x10] sm:$0xf] %v1165
      %1184 = vst [vmem:[%s1178 + $0x14] sm:$0xf] %v1166
      %1185 = vst [vmem:[%s1178 + $0x18] sm:$0xf] %v1167
      %1186 = vst [vmem:[%s1178 + $0x1c] sm:$0xf] %v1168
      %1187 = vst [vmem:[%s1178 + $0x20] sm:$0xf] %v1169
      %1188 = vst [vmem:[%s1178 + $0x24] sm:$0xf] %v1170
      %1189 = vst [vmem:[%s1178 + $0x28] sm:$0xf] %v1171
      %1190 = vst [vmem:[%s1178 + $0x2c] sm:$0xf] %v1172
      %1191 = vst [vmem:[%s1178 + $0x30] sm:$0xf] %v1173
      %1192 = vst [vmem:[%s1178 + $0x34] sm:$0xf] %v1174
      %1193 = vst [vmem:[%s1178 + $0x38] sm:$0xf] %v1175
      %1194 = vst [vmem:[%s1178 + $0x3c] sm:$0xf] %v1176
    $region93: #{tpu_custom_call.1} parent=1 // loop_footer
      %s400 = sadd.s32 1, %s396
    $region94: #{tpu_custom_call.1} parent=1 // loop_footer_branch
      %395 = sbr.rel target = $region90
    $region95: #{tpu_custom_call.1} parent=1 // loop_exit
      _
    loop: start=0, step=1, limit=2
    $region96: #{tpu_custom_call.1} parent=1 // loop_pre_header
      _
    $region97: #{tpu_custom_call.1} parent=1 // loop_header
      %s1196 = sphi 0, %s1200
      %p1197 = scmp.ge.s32.totalorder %s1196, 2
    $region98: #{tpu_custom_call.1} parent=1 // loop_header_branch
      %1199 = sbr.rel (%p1197) target = $region102
    $region99: #{tpu_custom_call.1} parent=1 // loop_body
      %s1201 = smul.u32 %s1196, 128
      %s1202 = sshra.s32 %s1201, 3
      %s1203 = sand.u32 %s1201, 7
      %s1204 = smul.u32 %s1202, 2
      %s1205 = smul.addr %s1204, 4
      %s1206 = scalar_lea.vmem %s0, %s1205
      %v1207 = vld [vmem:[%s1206] sm:$0xff]
      %v1208 = vld [vmem:[%s1206 + $0x8] sm:$0xff]
      %v1209 = vld [vmem:[%s1206 + $0x10] sm:$0xff]
      %v1210 = vld [vmem:[%s1206 + $0x18] sm:$0xff]
      %v1211 = vld [vmem:[%s1206 + $0x20] sm:$0xff]
      %v1212 = vld [vmem:[%s1206 + $0x28] sm:$0xff]
      %v1213 = vld [vmem:[%s1206 + $0x30] sm:$0xff]
      %v1214 = vld [vmem:[%s1206 + $0x38] sm:$0xff]
      %v1215 = vld [vmem:[%s1206 + $0x40] sm:$0xff]
      %v1216 = vld [vmem:[%s1206 + $0x48] sm:$0xff]
      %v1217 = vld [vmem:[%s1206 + $0x50] sm:$0xff]
      %v1218 = vld [vmem:[%s1206 + $0x58] sm:$0xff]
      %v1219 = vld [vmem:[%s1206 + $0x60] sm:$0xff]
      %v1220 = vld [vmem:[%s1206 + $0x68] sm:$0xff]
      %v1221 = vld [vmem:[%s1206 + $0x70] sm:$0xff]
      %v1222 = vld [vmem:[%s1206 + $0x78] sm:$0xff]
      %v1223 = vld [vmem:[#allocation3] sm:$0xf]
      %v1224 = vld [vmem:[#allocation3 + $0x4] sm:$0xf]
      %v1225 = vld [vmem:[#allocation3 + $0x8] sm:$0xf]
      %v1226 = vld [vmem:[#allocation3 + $0xc] sm:$0xf]
      %v1227 = vld [vmem:[#allocation3 + $0x10] sm:$0xf]
      %v1228 = vld [vmem:[#allocation3 + $0x14] sm:$0xf]
      %v1229 = vld [vmem:[#allocation3 + $0x18] sm:$0xf]
      %v1230 = vld [vmem:[#allocation3 + $0x1c] sm:$0xf]
      %v1231 = vld [vmem:[#allocation3 + $0x20] sm:$0xf]
      %v1232 = vld [vmem:[#allocation3 + $0x24] sm:$0xf]
      %v1233 = vld [vmem:[#allocation3 + $0x28] sm:$0xf]
      %v1234 = vld [vmem:[#allocation3 + $0x2c] sm:$0xf]
      %v1235 = vld [vmem:[#allocation3 + $0x30] sm:$0xf]
      %v1236 = vld [vmem:[#allocation3 + $0x34] sm:$0xf]
      %v1237 = vld [vmem:[#allocation3 + $0x38] sm:$0xf]
      %v1238 = vld [vmem:[#allocation3 + $0x3c] sm:$0xf]
      %v1239 = vld [vmem:[#allocation3 + $0x40] sm:$0xf]
      %v1240 = vld [vmem:[#allocation3 + $0x44] sm:$0xf]
      %v1241 = vld [vmem:[#allocation3 + $0x48] sm:$0xf]
      %v1242 = vld [vmem:[#allocation3 + $0x4c] sm:$0xf]
      %v1243 = vld [vmem:[#allocation3 + $0x50] sm:$0xf]
      %v1244 = vld [vmem:[#allocation3 + $0x54] sm:$0xf]
      %v1245 = vld [vmem:[#allocation3 + $0x58] sm:$0xf]
      %v1246 = vld [vmem:[#allocation3 + $0x5c] sm:$0xf]
      %v1247 = vld [vmem:[#allocation3 + $0x60] sm:$0xf]
      %v1248 = vld [vmem:[#allocation3 + $0x64] sm:$0xf]
      %v1249 = vld [vmem:[#allocation3 + $0x68] sm:$0xf]
      %v1250 = vld [vmem:[#allocation3 + $0x6c] sm:$0xf]
      %v1251 = vld [vmem:[#allocation3 + $0x70] sm:$0xf]
      %v1252 = vld [vmem:[#allocation3 + $0x74] sm:$0xf]
      %v1253 = vld [vmem:[#allocation3 + $0x78] sm:$0xf]
      %v1254 = vld [vmem:[#allocation3 + $0x7c] sm:$0xf]
      %v1271 = vunpack.c.l.b16 %v1207
      %v1272 = vunpack.c.h.b16 %v1207
      %v1273 = vunpack.c.l.b16 %v1208
      %v1274 = vunpack.c.h.b16 %v1208
      %v1275 = vunpack.c.l.b16 %v1209
      %v1276 = vunpack.c.h.b16 %v1209
      %v1277 = vunpack.c.l.b16 %v1210
      %v1278 = vunpack.c.h.b16 %v1210
      %v1279 = vunpack.c.l.b16 %v1211
      %v1280 = vunpack.c.h.b16 %v1211
      %v1281 = vunpack.c.l.b16 %v1212
      %v1282 = vunpack.c.h.b16 %v1212
      %v1283 = vunpack.c.l.b16 %v1213
      %v1284 = vunpack.c.h.b16 %v1213
      %v1285 = vunpack.c.l.b16 %v1214
      %v1286 = vunpack.c.h.b16 %v1214
      %v1287 = vunpack.c.l.b16 %v1215
      %v1288 = vunpack.c.h.b16 %v1215
      %v1289 = vunpack.c.l.b16 %v1216
      %v1290 = vunpack.c.h.b16 %v1216
      %v1291 = vunpack.c.l.b16 %v1217
      %v1292 = vunpack.c.h.b16 %v1217
      %v1293 = vunpack.c.l.b16 %v1218
      %v1294 = vunpack.c.h.b16 %v1218
      %v1295 = vunpack.c.l.b16 %v1219
      %v1296 = vunpack.c.h.b16 %v1219
      %v1297 = vunpack.c.l.b16 %v1220
      %v1298 = vunpack.c.h.b16 %v1220
      %v1299 = vunpack.c.l.b16 %v1221
      %v1300 = vunpack.c.h.b16 %v1221
      %v1301 = vunpack.c.l.b16 %v1222
      %v1302 = vunpack.c.h.b16 %v1222
      %v1303 = vpack.c.b16 %v1273, %v1271
      %v1304 = vpack.c.b16 %v1274, %v1272
      %v1305 = vpack.c.b16 %v1277, %v1275
      %v1306 = vpack.c.b16 %v1278, %v1276
      %v1307 = vpack.c.b16 %v1281, %v1279
      %v1308 = vpack.c.b16 %v1282, %v1280
      %v1309 = vpack.c.b16 %v1285, %v1283
      %v1310 = vpack.c.b16 %v1286, %v1284
      %v1311 = vpack.c.b16 %v1289, %v1287
      %v1312 = vpack.c.b16 %v1290, %v1288
      %v1313 = vpack.c.b16 %v1293, %v1291
      %v1314 = vpack.c.b16 %v1294, %v1292
      %v1315 = vpack.c.b16 %v1297, %v1295
      %v1316 = vpack.c.b16 %v1298, %v1296
      %v1317 = vpack.c.b16 %v1301, %v1299
      %v1318 = vpack.c.b16 %v1302, %v1300
      %v1367 = vunpack.c.l.b16 %v1223
      %v1368 = vunpack.c.l.b16 %v1224
      %v1369 = vunpack.c.l.b16 %v1225
      %v1370 = vunpack.c.l.b16 %v1226
      %v1371 = vunpack.c.l.b16 %v1227
      %v1372 = vunpack.c.l.b16 %v1228
      %v1373 = vunpack.c.l.b16 %v1229
      %v1374 = vunpack.c.l.b16 %v1230
      %v1375 = vunpack.c.l.b16 %v1231
      %v1376 = vunpack.c.l.b16 %v1232
      %v1377 = vunpack.c.l.b16 %v1233
      %v1378 = vunpack.c.l.b16 %v1234
      %v1379 = vunpack.c.l.b16 %v1235
      %v1380 = vunpack.c.l.b16 %v1236
      %v1381 = vunpack.c.l.b16 %v1237
      %v1382 = vunpack.c.l.b16 %v1238
      %v1383 = vunpack.c.l.b16 %v1239
      %v1384 = vunpack.c.l.b16 %v1240
      %v1385 = vunpack.c.l.b16 %v1241
      %v1386 = vunpack.c.l.b16 %v1242
      %v1387 = vunpack.c.l.b16 %v1243
      %v1388 = vunpack.c.l.b16 %v1244
      %v1389 = vunpack.c.l.b16 %v1245
      %v1390 = vunpack.c.l.b16 %v1246
      %v1391 = vunpack.c.l.b16 %v1247
      %v1392 = vunpack.c.l.b16 %v1248
      %v1393 = vunpack.c.l.b16 %v1249
      %v1394 = vunpack.c.l.b16 %v1250
      %v1395 = vunpack.c.l.b16 %v1251
      %v1396 = vunpack.c.l.b16 %v1252
      %v1397 = vunpack.c.l.b16 %v1253
      %v1398 = vunpack.c.l.b16 %v1254
      %v1399 = vpack.c.b16 %v1368, %v1367
      %v1400 = vpack.c.b16 %v1370, %v1369
      %v1401 = vpack.c.b16 %v1372, %v1371
      %v1402 = vpack.c.b16 %v1374, %v1373
      %v1403 = vpack.c.b16 %v1376, %v1375
      %v1404 = vpack.c.b16 %v1378, %v1377
      %v1405 = vpack.c.b16 %v1380, %v1379
      %v1406 = vpack.c.b16 %v1382, %v1381
      %v1407 = vpack.c.b16 %v1384, %v1383
      %v1408 = vpack.c.b16 %v1386, %v1385
      %v1409 = vpack.c.b16 %v1388, %v1387
      %v1410 = vpack.c.b16 %v1390, %v1389
      %v1411 = vpack.c.b16 %v1392, %v1391
      %v1412 = vpack.c.b16 %v1394, %v1393
      %v1413 = vpack.c.b16 %v1396, %v1395
      %v1414 = vpack.c.b16 %v1398, %v1397
      %1431 = vmatpush.bf16.msra.mxu0 %v1406
      %1432 = vmatpush.bf16.msra.mxu0 %v1405
      %1433 = vmatpush.bf16.msra.mxu0 %v1404
      %1434 = vmatpush.bf16.msra.mxu0 %v1403
      %1435 = vmatpush.bf16.msra.mxu0 %v1402
      %1436 = vmatpush.bf16.msra.mxu0 %v1401
      %1437 = vmatpush.bf16.msra.mxu0 %v1400
      %1438 = vmatpush.bf16.msra.mxu0 %v1399
      %1439 = vmatmul.bf16.gmra.mxu0 %v1303
      %v1440 = vpop.f32.mrf.mxu0
      %v1441 = vadd.f32 0.0, %v1440
      %v1442 = vpop.f32.mrf.mxu0
      %v1443 = vadd.f32 0.0, %v1442
      %1444 = vmatmul.bf16.gmra.mxu0 %v1305
      %v1445 = vpop.f32.mrf.mxu0
      %v1446 = vadd.f32 0.0, %v1445
      %v1447 = vpop.f32.mrf.mxu0
      %v1448 = vadd.f32 0.0, %v1447
      %1449 = vmatmul.bf16.gmra.mxu0 %v1307
      %v1450 = vpop.f32.mrf.mxu0
      %v1451 = vadd.f32 0.0, %v1450
      %v1452 = vpop.f32.mrf.mxu0
      %v1453 = vadd.f32 0.0, %v1452
      %1454 = vmatmul.bf16.gmra.mxu0 %v1309
      %v1455 = vpop.f32.mrf.mxu0
      %v1456 = vadd.f32 0.0, %v1455
      %v1457 = vpop.f32.mrf.mxu0
      %v1458 = vadd.f32 0.0, %v1457
      %1459 = vmatmul.bf16.gmra.mxu0 %v1311
      %v1460 = vpop.f32.mrf.mxu0
      %v1461 = vadd.f32 0.0, %v1460
      %v1462 = vpop.f32.mrf.mxu0
      %v1463 = vadd.f32 0.0, %v1462
      %1464 = vmatmul.bf16.gmra.mxu0 %v1313
      %v1465 = vpop.f32.mrf.mxu0
      %v1466 = vadd.f32 0.0, %v1465
      %v1467 = vpop.f32.mrf.mxu0
      %v1468 = vadd.f32 0.0, %v1467
      %1469 = vmatmul.bf16.gmra.mxu0 %v1315
      %v1470 = vpop.f32.mrf.mxu0
      %v1471 = vadd.f32 0.0, %v1470
      %v1472 = vpop.f32.mrf.mxu0
      %v1473 = vadd.f32 0.0, %v1472
      %1474 = vmatmul.bf16.gmra.mxu0 %v1317
      %v1475 = vpop.f32.mrf.mxu0
      %v1476 = vadd.f32 0.0, %v1475
      %v1477 = vpop.f32.mrf.mxu0
      %v1478 = vadd.f32 0.0, %v1477
      %1479 = vdwg.mxu0
      %1480 = vmatpush.bf16.msra.mxu0 %v1414
      %1481 = vmatpush.bf16.msra.mxu0 %v1413
      %1482 = vmatpush.bf16.msra.mxu0 %v1412
      %1483 = vmatpush.bf16.msra.mxu0 %v1411
      %1484 = vmatpush.bf16.msra.mxu0 %v1410
      %1485 = vmatpush.bf16.msra.mxu0 %v1409
      %1486 = vmatpush.bf16.msra.mxu0 %v1408
      %1487 = vmatpush.bf16.msra.mxu0 %v1407
      %1488 = vmatmul.bf16.gmra.mxu0 %v1304
      %v1489 = vpop.f32.mrf.mxu0
      %v1490 = vadd.f32 %v1441, %v1489
      %v1491 = vpop.f32.mrf.mxu0
      %v1492 = vadd.f32 %v1443, %v1491
      %1493 = vmatmul.bf16.gmra.mxu0 %v1306
      %v1494 = vpop.f32.mrf.mxu0
      %v1495 = vadd.f32 %v1446, %v1494
      %v1496 = vpop.f32.mrf.mxu0
      %v1497 = vadd.f32 %v1448, %v1496
      %1498 = vmatmul.bf16.gmra.mxu0 %v1308
      %v1499 = vpop.f32.mrf.mxu0
      %v1500 = vadd.f32 %v1451, %v1499
      %v1501 = vpop.f32.mrf.mxu0
      %v1502 = vadd.f32 %v1453, %v1501
      %1503 = vmatmul.bf16.gmra.mxu0 %v1310
      %v1504 = vpop.f32.mrf.mxu0
      %v1505 = vadd.f32 %v1456, %v1504
      %v1506 = vpop.f32.mrf.mxu0
      %v1507 = vadd.f32 %v1458, %v1506
      %1508 = vmatmul.bf16.gmra.mxu0 %v1312
      %v1509 = vpop.f32.mrf.mxu0
      %v1510 = vadd.f32 %v1461, %v1509
      %v1511 = vpop.f32.mrf.mxu0
      %v1512 = vadd.f32 %v1463, %v1511
      %1513 = vmatmul.bf16.gmra.mxu0 %v1314
      %v1514 = vpop.f32.mrf.mxu0
      %v1515 = vadd.f32 %v1466, %v1514
      %v1516 = vpop.f32.mrf.mxu0
      %v1517 = vadd.f32 %v1468, %v1516
      %1518 = vmatmul.bf16.gmra.mxu0 %v1316
      %v1519 = vpop.f32.mrf.mxu0
      %v1520 = vadd.f32 %v1471, %v1519
      %v1521 = vpop.f32.mrf.mxu0
      %v1522 = vadd.f32 %v1473, %v1521
      %1523 = vmatmul.bf16.gmra.mxu0 %v1318
      %v1524 = vpop.f32.mrf.mxu0
      %v1525 = vadd.f32 %v1476, %v1524
      %v1526 = vpop.f32.mrf.mxu0
      %v1527 = vadd.f32 %v1478, %v1526
      %1528 = vdwg.mxu0
      %s1529 = scalar_lea.vmem %s1, %s1201
      %v1530 = vld [vmem:[%s1529] sm:$0xff]
      %v1531 = vld [vmem:[%s1529 + $0x8] sm:$0xff]
      %v1532 = vld [vmem:[%s1529 + $0x10] sm:$0xff]
      %v1533 = vld [vmem:[%s1529 + $0x18] sm:$0xff]
      %v1534 = vld [vmem:[%s1529 + $0x20] sm:$0xff]
      %v1535 = vld [vmem:[%s1529 + $0x28] sm:$0xff]
      %v1536 = vld [vmem:[%s1529 + $0x30] sm:$0xff]
      %v1537 = vld [vmem:[%s1529 + $0x38] sm:$0xff]
      %v1538 = vld [vmem:[%s1529 + $0x40] sm:$0xff]
      %v1539 = vld [vmem:[%s1529 + $0x48] sm:$0xff]
      %v1540 = vld [vmem:[%s1529 + $0x50] sm:$0xff]
      %v1541 = vld [vmem:[%s1529 + $0x58] sm:$0xff]
      %v1542 = vld [vmem:[%s1529 + $0x60] sm:$0xff]
      %v1543 = vld [vmem:[%s1529 + $0x68] sm:$0xff]
      %v1544 = vld [vmem:[%s1529 + $0x70] sm:$0xff]
      %v1545 = vld [vmem:[%s1529 + $0x78] sm:$0xff]
      %1547 = vset.pattern.permute.xlu0 0
      %1548 = vperm.xlu0 %1547, %v1530
      %v1549 = vpop.permute.xlu0 %1548
      %1552 = vset.pattern.permute.xlu0 0
      %1553 = vperm.xlu0 %1552, %v1531
      %v1554 = vpop.permute.xlu0 %1553
      %1557 = vset.pattern.permute.xlu0 0
      %1558 = vperm.xlu0 %1557, %v1532
      %v1559 = vpop.permute.xlu0 %1558
      %1562 = vset.pattern.permute.xlu0 0
      %1563 = vperm.xlu0 %1562, %v1533
      %v1564 = vpop.permute.xlu0 %1563
      %1567 = vset.pattern.permute.xlu0 0
      %1568 = vperm.xlu0 %1567, %v1534
      %v1569 = vpop.permute.xlu0 %1568
      %1572 = vset.pattern.permute.xlu0 0
      %1573 = vperm.xlu0 %1572, %v1535
      %v1574 = vpop.permute.xlu0 %1573
      %1577 = vset.pattern.permute.xlu0 0
      %1578 = vperm.xlu0 %1577, %v1536
      %v1579 = vpop.permute.xlu0 %1578
      %1582 = vset.pattern.permute.xlu0 0
      %1583 = vperm.xlu0 %1582, %v1537
      %v1584 = vpop.permute.xlu0 %1583
      %1587 = vset.pattern.permute.xlu0 0
      %1588 = vperm.xlu0 %1587, %v1538
      %v1589 = vpop.permute.xlu0 %1588
      %1592 = vset.pattern.permute.xlu0 0
      %1593 = vperm.xlu0 %1592, %v1539
      %v1594 = vpop.permute.xlu0 %1593
      %1597 = vset.pattern.permute.xlu0 0
      %1598 = vperm.xlu0 %1597, %v1540
      %v1599 = vpop.permute.xlu0 %1598
      %1602 = vset.pattern.permute.xlu0 0
      %1603 = vperm.xlu0 %1602, %v1541
      %v1604 = vpop.permute.xlu0 %1603
      %1607 = vset.pattern.permute.xlu0 0
      %1608 = vperm.xlu0 %1607, %v1542
      %v1609 = vpop.permute.xlu0 %1608
      %1612 = vset.pattern.permute.xlu0 0
      %1613 = vperm.xlu0 %1612, %v1543
      %v1614 = vpop.permute.xlu0 %1613
      %1617 = vset.pattern.permute.xlu0 0
      %1618 = vperm.xlu0 %1617, %v1544
      %v1619 = vpop.permute.xlu0 %1618
      %1622 = vset.pattern.permute.xlu0 0
      %1623 = vperm.xlu0 %1622, %v1545
      %v1624 = vpop.permute.xlu0 %1623
      %v1626 = vmul.f32 %v1490, %v1549
      %v1627 = vmul.f32 %v1492, %v1554
      %v1628 = vmul.f32 %v1495, %v1559
      %v1629 = vmul.f32 %v1497, %v1564
      %v1630 = vmul.f32 %v1500, %v1569
      %v1631 = vmul.f32 %v1502, %v1574
      %v1632 = vmul.f32 %v1505, %v1579
      %v1633 = vmul.f32 %v1507, %v1584
      %v1634 = vmul.f32 %v1510, %v1589
      %v1635 = vmul.f32 %v1512, %v1594
      %v1636 = vmul.f32 %v1515, %v1599
      %v1637 = vmul.f32 %v1517, %v1604
      %v1638 = vmul.f32 %v1520, %v1609
      %v1639 = vmul.f32 %v1522, %v1614
      %v1640 = vmul.f32 %v1525, %v1619
      %v1641 = vmul.f32 %v1527, %v1624
      %v1642 = vpack.c.bf16 %v1627, %v1626
      %v1643 = vpack.c.bf16 %v1629, %v1628
      %v1644 = vpack.c.bf16 %v1631, %v1630
      %v1645 = vpack.c.bf16 %v1633, %v1632
      %v1646 = vpack.c.bf16 %v1635, %v1634
      %v1647 = vpack.c.bf16 %v1637, %v1636
      %v1648 = vpack.c.bf16 %v1639, %v1638
      %v1649 = vpack.c.bf16 %v1641, %v1640
      %v1650 = vld [vmem:[#allocation12] sm:$0xf]
      %v1651 = vld [vmem:[#allocation12 + $0x4] sm:$0xf]
      %v1652 = vld [vmem:[#allocation12 + $0x8] sm:$0xf]
      %v1653 = vld [vmem:[#allocation12 + $0xc] sm:$0xf]
      %v1654 = vld [vmem:[#allocation12 + $0x10] sm:$0xf]
      %v1655 = vld [vmem:[#allocation12 + $0x14] sm:$0xf]
      %v1656 = vld [vmem:[#allocation12 + $0x18] sm:$0xf]
      %v1657 = vld [vmem:[#allocation12 + $0x1c] sm:$0xf]
      %v1658 = vld [vmem:[#allocation12 + $0x20] sm:$0xf]
      %v1659 = vld [vmem:[#allocation12 + $0x24] sm:$0xf]
      %v1660 = vld [vmem:[#allocation12 + $0x28] sm:$0xf]
      %v1661 = vld [vmem:[#allocation12 + $0x2c] sm:$0xf]
      %v1662 = vld [vmem:[#allocation12 + $0x30] sm:$0xf]
      %v1663 = vld [vmem:[#allocation12 + $0x34] sm:$0xf]
      %v1664 = vld [vmem:[#allocation12 + $0x38] sm:$0xf]
      %v1665 = vld [vmem:[#allocation12 + $0x3c] sm:$0xf]
      %v1666 = vld [vmem:[%s9] sm:$0x1]
      %v1667 = vunpack.c.l.bf16 %v1666
      %v1668 = vperm.slane %v1667, 0
      %v1685 = vunpack.c.l.b16 %v1650
      %v1686 = vunpack.c.l.b16 %v1651
      %v1687 = vunpack.c.l.b16 %v1652
      %v1688 = vunpack.c.l.b16 %v1653
      %v1689 = vunpack.c.l.b16 %v1654
      %v1690 = vunpack.c.l.b16 %v1655
      %v1691 = vunpack.c.l.b16 %v1656
      %v1692 = vunpack.c.l.b16 %v1657
      %v1693 = vunpack.c.l.b16 %v1658
      %v1694 = vunpack.c.l.b16 %v1659
      %v1695 = vunpack.c.l.b16 %v1660
      %v1696 = vunpack.c.l.b16 %v1661
      %v1697 = vunpack.c.l.b16 %v1662
      %v1698 = vunpack.c.l.b16 %v1663
      %v1699 = vunpack.c.l.b16 %v1664
      %v1700 = vunpack.c.l.b16 %v1665
      %v1701 = vpack.c.b16 %v1686, %v1685
      %v1702 = vpack.c.b16 %v1688, %v1687
      %v1703 = vpack.c.b16 %v1690, %v1689
      %v1704 = vpack.c.b16 %v1692, %v1691
      %v1705 = vpack.c.b16 %v1694, %v1693
      %v1706 = vpack.c.b16 %v1696, %v1695
      %v1707 = vpack.c.b16 %v1698, %v1697
      %v1708 = vpack.c.b16 %v1700, %v1699
      %1717 = vmatpush.bf16.msra.mxu0 %v1708
      %1718 = vmatpush.bf16.msra.mxu0 %v1707
      %1719 = vmatpush.bf16.msra.mxu0 %v1706
      %1720 = vmatpush.bf16.msra.mxu0 %v1705
      %1721 = vmatpush.bf16.msra.mxu0 %v1704
      %1722 = vmatpush.bf16.msra.mxu0 %v1703
      %1723 = vmatpush.bf16.msra.mxu0 %v1702
      %1724 = vmatpush.bf16.msra.mxu0 %v1701
      %1725 = vmatmul.bf16.gmra.mxu0 %v1642
      %v1726 = vpop.f32.mrf.mxu0
      %v1727 = vadd.f32 %v1668, %v1726
      %v1728 = vpop.f32.mrf.mxu0
      %v1729 = vadd.f32 %v1668, %v1728
      %1730 = vmatmul.bf16.gmra.mxu0 %v1643
      %v1731 = vpop.f32.mrf.mxu0
      %v1732 = vadd.f32 %v1668, %v1731
      %v1733 = vpop.f32.mrf.mxu0
      %v1734 = vadd.f32 %v1668, %v1733
      %1735 = vmatmul.bf16.gmra.mxu0 %v1644
      %v1736 = vpop.f32.mrf.mxu0
      %v1737 = vadd.f32 %v1668, %v1736
      %v1738 = vpop.f32.mrf.mxu0
      %v1739 = vadd.f32 %v1668, %v1738
      %1740 = vmatmul.bf16.gmra.mxu0 %v1645
      %v1741 = vpop.f32.mrf.mxu0
      %v1742 = vadd.f32 %v1668, %v1741
      %v1743 = vpop.f32.mrf.mxu0
      %v1744 = vadd.f32 %v1668, %v1743
      %1745 = vmatmul.bf16.gmra.mxu0 %v1646
      %v1746 = vpop.f32.mrf.mxu0
      %v1747 = vadd.f32 %v1668, %v1746
      %v1748 = vpop.f32.mrf.mxu0
      %v1749 = vadd.f32 %v1668, %v1748
      %1750 = vmatmul.bf16.gmra.mxu0 %v1647
      %v1751 = vpop.f32.mrf.mxu0
      %v1752 = vadd.f32 %v1668, %v1751
      %v1753 = vpop.f32.mrf.mxu0
      %v1754 = vadd.f32 %v1668, %v1753
      %1755 = vmatmul.bf16.gmra.mxu0 %v1648
      %v1756 = vpop.f32.mrf.mxu0
      %v1757 = vadd.f32 %v1668, %v1756
      %v1758 = vpop.f32.mrf.mxu0
      %v1759 = vadd.f32 %v1668, %v1758
      %1760 = vmatmul.bf16.gmra.mxu0 %v1649
      %v1761 = vpop.f32.mrf.mxu0
      %v1762 = vadd.f32 %v1668, %v1761
      %v1763 = vpop.f32.mrf.mxu0
      %v1764 = vadd.f32 %v1668, %v1763
      %1765 = vdwg.mxu0
      %s1766 = smul.addr %s1202, 4
      %s1767 = scalar_lea.vmem [#allocation3], %s1766
      %v1768 = vld [vmem:[%s1767] sm:$0xf]
      %v1769 = vld [vmem:[%s1767 + $0x4] sm:$0xf]
      %v1770 = vld [vmem:[%s1767 + $0x8] sm:$0xf]
      %v1771 = vld [vmem:[%s1767 + $0xc] sm:$0xf]
      %v1772 = vld [vmem:[%s1767 + $0x10] sm:$0xf]
      %v1773 = vld [vmem:[%s1767 + $0x14] sm:$0xf]
      %v1774 = vld [vmem:[%s1767 + $0x18] sm:$0xf]
      %v1775 = vld [vmem:[%s1767 + $0x1c] sm:$0xf]
      %v1776 = vld [vmem:[%s1767 + $0x20] sm:$0xf]
      %v1777 = vld [vmem:[%s1767 + $0x24] sm:$0xf]
      %v1778 = vld [vmem:[%s1767 + $0x28] sm:$0xf]
      %v1779 = vld [vmem:[%s1767 + $0x2c] sm:$0xf]
      %v1780 = vld [vmem:[%s1767 + $0x30] sm:$0xf]
      %v1781 = vld [vmem:[%s1767 + $0x34] sm:$0xf]
      %v1782 = vld [vmem:[%s1767 + $0x38] sm:$0xf]
      %v1783 = vld [vmem:[%s1767 + $0x3c] sm:$0xf]
      %v1784 = vld [vmem:[#allocation13] sm:$0xf]
      %v1785 = vld [vmem:[#allocation13 + $0x4] sm:$0xf]
      %v1786 = vld [vmem:[#allocation13 + $0x8] sm:$0xf]
      %v1787 = vld [vmem:[#allocation13 + $0xc] sm:$0xf]
      %v1788 = vld [vmem:[#allocation13 + $0x10] sm:$0xf]
      %v1789 = vld [vmem:[#allocation13 + $0x14] sm:$0xf]
      %v1790 = vld [vmem:[#allocation13 + $0x18] sm:$0xf]
      %v1791 = vld [vmem:[#allocation13 + $0x1c] sm:$0xf]
      %v1792 = vld [vmem:[#allocation13 + $0x20] sm:$0xf]
      %v1793 = vld [vmem:[#allocation13 + $0x24] sm:$0xf]
      %v1794 = vld [vmem:[#allocation13 + $0x28] sm:$0xf]
      %v1795 = vld [vmem:[#allocation13 + $0x2c] sm:$0xf]
      %v1796 = vld [vmem:[#allocation13 + $0x30] sm:$0xf]
      %v1797 = vld [vmem:[#allocation13 + $0x34] sm:$0xf]
      %v1798 = vld [vmem:[#allocation13 + $0x38] sm:$0xf]
      %v1799 = vld [vmem:[#allocation13 + $0x3c] sm:$0xf]
      %v1816 = vunpack.c.l.b16 %v1768
      %v1817 = vunpack.c.l.b16 %v1769
      %v1818 = vunpack.c.l.b16 %v1770
      %v1819 = vunpack.c.l.b16 %v1771
      %v1820 = vunpack.c.l.b16 %v1772
      %v1821 = vunpack.c.l.b16 %v1773
      %v1822 = vunpack.c.l.b16 %v1774
      %v1823 = vunpack.c.l.b16 %v1775
      %v1824 = vunpack.c.l.b16 %v1776
      %v1825 = vunpack.c.l.b16 %v1777
      %v1826 = vunpack.c.l.b16 %v1778
      %v1827 = vunpack.c.l.b16 %v1779
      %v1828 = vunpack.c.l.b16 %v1780
      %v1829 = vunpack.c.l.b16 %v1781
      %v1830 = vunpack.c.l.b16 %v1782
      %v1831 = vunpack.c.l.b16 %v1783
      %v1832 = vpack.c.b16 %v1817, %v1816
      %v1833 = vpack.c.b16 %v1819, %v1818
      %v1834 = vpack.c.b16 %v1821, %v1820
      %v1835 = vpack.c.b16 %v1823, %v1822
      %v1836 = vpack.c.b16 %v1825, %v1824
      %v1837 = vpack.c.b16 %v1827, %v1826
      %v1838 = vpack.c.b16 %v1829, %v1828
      %v1839 = vpack.c.b16 %v1831, %v1830
      %v1864 = vunpack.c.l.b16 %v1784
      %v1865 = vunpack.c.l.b16 %v1785
      %v1866 = vunpack.c.l.b16 %v1786
      %v1867 = vunpack.c.l.b16 %v1787
      %v1868 = vunpack.c.l.b16 %v1788
      %v1869 = vunpack.c.l.b16 %v1789
      %v1870 = vunpack.c.l.b16 %v1790
      %v1871 = vunpack.c.l.b16 %v1791
      %v1872 = vunpack.c.l.b16 %v1792
      %v1873 = vunpack.c.l.b16 %v1793
      %v1874 = vunpack.c.l.b16 %v1794
      %v1875 = vunpack.c.l.b16 %v1795
      %v1876 = vunpack.c.l.b16 %v1796
      %v1877 = vunpack.c.l.b16 %v1797
      %v1878 = vunpack.c.l.b16 %v1798
      %v1879 = vunpack.c.l.b16 %v1799
      %v1880 = vpack.c.b16 %v1865, %v1864
      %v1881 = vpack.c.b16 %v1867, %v1866
      %v1882 = vpack.c.b16 %v1869, %v1868
      %v1883 = vpack.c.b16 %v1871, %v1870
      %v1884 = vpack.c.b16 %v1873, %v1872
      %v1885 = vpack.c.b16 %v1875, %v1874
      %v1886 = vpack.c.b16 %v1877, %v1876
      %v1887 = vpack.c.b16 %v1879, %v1878
      %1896 = vmatpush.bf16.msra.mxu0 %v1887
      %1897 = vmatpush.bf16.msra.mxu0 %v1886
      %1898 = vmatpush.bf16.msra.mxu0 %v1885
      %1899 = vmatpush.bf16.msra.mxu0 %v1884
      %1900 = vmatpush.bf16.msra.mxu0 %v1883
      %1901 = vmatpush.bf16.msra.mxu0 %v1882
      %1902 = vmatpush.bf16.msra.mxu0 %v1881
      %1903 = vmatpush.bf16.msra.mxu0 %v1880
      %1904 = vmatmul.bf16.gmra.mxu0 %v1832
      %v1905 = vpop.f32.mrf.mxu0
      %v1906 = vadd.f32 0.0, %v1905
      %v1907 = vpop.f32.mrf.mxu0
      %v1908 = vadd.f32 0.0, %v1907
      %1909 = vmatmul.bf16.gmra.mxu0 %v1833
      %v1910 = vpop.f32.mrf.mxu0
      %v1911 = vadd.f32 0.0, %v1910
      %v1912 = vpop.f32.mrf.mxu0
      %v1913 = vadd.f32 0.0, %v1912
      %1914 = vmatmul.bf16.gmra.mxu0 %v1834
      %v1915 = vpop.f32.mrf.mxu0
      %v1916 = vadd.f32 0.0, %v1915
      %v1917 = vpop.f32.mrf.mxu0
      %v1918 = vadd.f32 0.0, %v1917
      %1919 = vmatmul.bf16.gmra.mxu0 %v1835
      %v1920 = vpop.f32.mrf.mxu0
      %v1921 = vadd.f32 0.0, %v1920
      %v1922 = vpop.f32.mrf.mxu0
      %v1923 = vadd.f32 0.0, %v1922
      %1924 = vmatmul.bf16.gmra.mxu0 %v1836
      %v1925 = vpop.f32.mrf.mxu0
      %v1926 = vadd.f32 0.0, %v1925
      %v1927 = vpop.f32.mrf.mxu0
      %v1928 = vadd.f32 0.0, %v1927
      %1929 = vmatmul.bf16.gmra.mxu0 %v1837
      %v1930 = vpop.f32.mrf.mxu0
      %v1931 = vadd.f32 0.0, %v1930
      %v1932 = vpop.f32.mrf.mxu0
      %v1933 = vadd.f32 0.0, %v1932
      %1934 = vmatmul.bf16.gmra.mxu0 %v1838
      %v1935 = vpop.f32.mrf.mxu0
      %v1936 = vadd.f32 0.0, %v1935
      %v1937 = vpop.f32.mrf.mxu0
      %v1938 = vadd.f32 0.0, %v1937
      %1939 = vmatmul.bf16.gmra.mxu0 %v1839
      %v1940 = vpop.f32.mrf.mxu0
      %v1941 = vadd.f32 0.0, %v1940
      %v1942 = vpop.f32.mrf.mxu0
      %v1943 = vadd.f32 0.0, %v1942
      %1944 = vdwg.mxu0
      %v1945 = vadd.f32 %v1727, %v1906
      %v1946 = vadd.f32 %v1729, %v1908
      %v1947 = vadd.f32 %v1732, %v1911
      %v1948 = vadd.f32 %v1734, %v1913
      %v1949 = vadd.f32 %v1737, %v1916
      %v1950 = vadd.f32 %v1739, %v1918
      %v1951 = vadd.f32 %v1742, %v1921
      %v1952 = vadd.f32 %v1744, %v1923
      %v1953 = vadd.f32 %v1747, %v1926
      %v1954 = vadd.f32 %v1749, %v1928
      %v1955 = vadd.f32 %v1752, %v1931
      %v1956 = vadd.f32 %v1754, %v1933
      %v1957 = vadd.f32 %v1757, %v1936
      %v1958 = vadd.f32 %v1759, %v1938
      %v1959 = vadd.f32 %v1762, %v1941
      %v1960 = vadd.f32 %v1764, %v1943
      %v1961 = vpack.c.bf16 %v1946, %v1945
      %v1962 = vpack.c.bf16 %v1948, %v1947
      %v1963 = vpack.c.bf16 %v1950, %v1949
      %v1964 = vpack.c.bf16 %v1952, %v1951
      %v1965 = vpack.c.bf16 %v1954, %v1953
      %v1966 = vpack.c.bf16 %v1956, %v1955
      %v1967 = vpack.c.bf16 %v1958, %v1957
      %v1968 = vpack.c.bf16 %v1960, %v1959
      %v1969 = vld [vmem:[#allocation15] sm:$0xf]
      %v1970 = vld [vmem:[#allocation15 + $0x4] sm:$0xf]
      %v1971 = vld [vmem:[#allocation15 + $0x8] sm:$0xf]
      %v1972 = vld [vmem:[#allocation15 + $0xc] sm:$0xf]
      %v1973 = vld [vmem:[#allocation15 + $0x10] sm:$0xf]
      %v1974 = vld [vmem:[#allocation15 + $0x14] sm:$0xf]
      %v1975 = vld [vmem:[#allocation15 + $0x18] sm:$0xf]
      %v1976 = vld [vmem:[#allocation15 + $0x1c] sm:$0xf]
      %v1977 = vld [vmem:[#allocation15 + $0x20] sm:$0xf]
      %v1978 = vld [vmem:[#allocation15 + $0x24] sm:$0xf]
      %v1979 = vld [vmem:[#allocation15 + $0x28] sm:$0xf]
      %v1980 = vld [vmem:[#allocation15 + $0x2c] sm:$0xf]
      %v1981 = vld [vmem:[#allocation15 + $0x30] sm:$0xf]
      %v1982 = vld [vmem:[#allocation15 + $0x34] sm:$0xf]
      %v1983 = vld [vmem:[#allocation15 + $0x38] sm:$0xf]
      %v1984 = vld [vmem:[#allocation15 + $0x3c] sm:$0xf]
      %v1985 = vld [vmem:[%s12] sm:$0x1]
      %v1986 = vunpack.c.l.bf16 %v1985
      %v1987 = vperm.slane %v1986, 0
      %v2004 = vunpack.c.l.b16 %v1969
      %v2005 = vunpack.c.l.b16 %v1970
      %v2006 = vunpack.c.l.b16 %v1971
      %v2007 = vunpack.c.l.b16 %v1972
      %v2008 = vunpack.c.l.b16 %v1973
      %v2009 = vunpack.c.l.b16 %v1974
      %v2010 = vunpack.c.l.b16 %v1975
      %v2011 = vunpack.c.l.b16 %v1976
      %v2012 = vunpack.c.l.b16 %v1977
      %v2013 = vunpack.c.l.b16 %v1978
      %v2014 = vunpack.c.l.b16 %v1979
      %v2015 = vunpack.c.l.b16 %v1980
      %v2016 = vunpack.c.l.b16 %v1981
      %v2017 = vunpack.c.l.b16 %v1982
      %v2018 = vunpack.c.l.b16 %v1983
      %v2019 = vunpack.c.l.b16 %v1984
      %v2020 = vpack.c.b16 %v2005, %v2004
      %v2021 = vpack.c.b16 %v2007, %v2006
      %v2022 = vpack.c.b16 %v2009, %v2008
      %v2023 = vpack.c.b16 %v2011, %v2010
      %v2024 = vpack.c.b16 %v2013, %v2012
      %v2025 = vpack.c.b16 %v2015, %v2014
      %v2026 = vpack.c.b16 %v2017, %v2016
      %v2027 = vpack.c.b16 %v2019, %v2018
      %2036 = vmatpush.bf16.msra.mxu0 %v2027
      %2037 = vmatpush.bf16.msra.mxu0 %v2026
      %2038 = vmatpush.bf16.msra.mxu0 %v2025
      %2039 = vmatpush.bf16.msra.mxu0 %v2024
      %2040 = vmatpush.bf16.msra.mxu0 %v2023
      %2041 = vmatpush.bf16.msra.mxu0 %v2022
      %2042 = vmatpush.bf16.msra.mxu0 %v2021
      %2043 = vmatpush.bf16.msra.mxu0 %v2020
      %2044 = vmatmul.bf16.gmra.mxu0 %v1961
      %v2045 = vpop.f32.mrf.mxu0
      %v2046 = vadd.f32 %v1987, %v2045
      %v2047 = vpop.f32.mrf.mxu0
      %v2048 = vadd.f32 %v1987, %v2047
      %2049 = vmatmul.bf16.gmra.mxu0 %v1962
      %v2050 = vpop.f32.mrf.mxu0
      %v2051 = vadd.f32 %v1987, %v2050
      %v2052 = vpop.f32.mrf.mxu0
      %v2053 = vadd.f32 %v1987, %v2052
      %2054 = vmatmul.bf16.gmra.mxu0 %v1963
      %v2055 = vpop.f32.mrf.mxu0
      %v2056 = vadd.f32 %v1987, %v2055
      %v2057 = vpop.f32.mrf.mxu0
      %v2058 = vadd.f32 %v1987, %v2057
      %2059 = vmatmul.bf16.gmra.mxu0 %v1964
      %v2060 = vpop.f32.mrf.mxu0
      %v2061 = vadd.f32 %v1987, %v2060
      %v2062 = vpop.f32.mrf.mxu0
      %v2063 = vadd.f32 %v1987, %v2062
      %2064 = vmatmul.bf16.gmra.mxu0 %v1965
      %v2065 = vpop.f32.mrf.mxu0
      %v2066 = vadd.f32 %v1987, %v2065
      %v2067 = vpop.f32.mrf.mxu0
      %v2068 = vadd.f32 %v1987, %v2067
      %2069 = vmatmul.bf16.gmra.mxu0 %v1966
      %v2070 = vpop.f32.mrf.mxu0
      %v2071 = vadd.f32 %v1987, %v2070
      %v2072 = vpop.f32.mrf.mxu0
      %v2073 = vadd.f32 %v1987, %v2072
      %2074 = vmatmul.bf16.gmra.mxu0 %v1967
      %v2075 = vpop.f32.mrf.mxu0
      %v2076 = vadd.f32 %v1987, %v2075
      %v2077 = vpop.f32.mrf.mxu0
      %v2078 = vadd.f32 %v1987, %v2077
      %2079 = vmatmul.bf16.gmra.mxu0 %v1968
      %v2080 = vpop.f32.mrf.mxu0
      %v2081 = vadd.f32 %v1987, %v2080
      %v2082 = vpop.f32.mrf.mxu0
      %v2083 = vadd.f32 %v1987, %v2082
      %2084 = vdwg.mxu0
      %s2085 = scalar_lea.vmem [#allocation16], %s1201
      %2086 = vst [vmem:[%s2085] sm:$0xff] %v2046
      %2087 = vst [vmem:[%s2085 + $0x8] sm:$0xff] %v2048
      %2088 = vst [vmem:[%s2085 + $0x10] sm:$0xff] %v2051
      %2089 = vst [vmem:[%s2085 + $0x18] sm:$0xff] %v2053
      %2090 = vst [vmem:[%s2085 + $0x20] sm:$0xff] %v2056
      %2091 = vst [vmem:[%s2085 + $0x28] sm:$0xff] %v2058
      %2092 = vst [vmem:[%s2085 + $0x30] sm:$0xff] %v2061
      %2093 = vst [vmem:[%s2085 + $0x38] sm:$0xff] %v2063
      %2094 = vst [vmem:[%s2085 + $0x40] sm:$0xff] %v2066
      %2095 = vst [vmem:[%s2085 + $0x48] sm:$0xff] %v2068
      %2096 = vst [vmem:[%s2085 + $0x50] sm:$0xff] %v2071
      %2097 = vst [vmem:[%s2085 + $0x58] sm:$0xff] %v2073
      %2098 = vst [vmem:[%s2085 + $0x60] sm:$0xff] %v2076
      %2099 = vst [vmem:[%s2085 + $0x68] sm:$0xff] %v2078
      %2100 = vst [vmem:[%s2085 + $0x70] sm:$0xff] %v2081
      %2101 = vst [vmem:[%s2085 + $0x78] sm:$0xff] %v2083
    $region100: #{tpu_custom_call.1} parent=1 // loop_footer
      %s1200 = sadd.s32 1, %s1196
    $region101: #{tpu_custom_call.1} parent=1 // loop_footer_branch
      %1195 = sbr.rel target = $region97
    $region102: #{tpu_custom_call.1} parent=1 // loop_exit
      _
    // Predicated region
    $region103: #{tpu_custom_call.1} parent=1 // pred_check
      _
    $region104: #{tpu_custom_call.1} parent=1 // pred_check_branch
      %2103 = sbr.rel (0) target = $region106
    $region105: #{tpu_custom_call.1} parent=1 // pred_region
      %2105 = vsyncadd [#allocation6], 0
      %s2106 = sshll.u32 [#allocation16], 4
      %s2107 = int_to_ptr.vmem [resolvable:$true] %s2106
      %s2108 = sshll.u32 %s13, 4
      %s2109 = int_to_ptr.hbm [resolvable:$true] %s2108
      %2114 = dma.vmem_to_hbm [thread:$0]  %s2107, 4096, %s2109, [#allocation6], 128, 128, 8
    $region106: #{tpu_custom_call.1} parent=1 // pred_fallthru
      _
    // Predicated region
    $region107: #{tpu_custom_call.1} parent=1 // pred_check
      _
    $region108: #{tpu_custom_call.1} parent=1 // pred_check_branch
      %2116 = sbr.rel (0) target = $region110
    $region109: #{tpu_custom_call.1} parent=1 // pred_region
      %2118 = dma.done [#allocation6], 4096
    $region110: #{tpu_custom_call.1} parent=1 // pred_fallthru
      _
    %2119 = vsyncpa [#allocation5], 1
    %2120 = vsyncpa [#allocation8], 1
    %2121 = vsyncpa [#allocation11], 1
    %2122 = vsyncpa [#allocation14], 1
    %2123 = vsyncpa [#allocation6], 1

</llo_original>
